<compile_context>
chip_gen: v7x
topology: tpu7x:2x2x1
jax: 0.10.0
libtpu: 0.0.40
codegen_flags: <defaults>
</compile_context>

<pallas_src>
import functools
import math

import jax
import jax.numpy as jnp
from jax import lax
from jax.experimental import pallas as pl
from jax.experimental.pallas import tpu as pltpu


def _clamp_vmem(nbytes):
    return int(min(max(nbytes, 16 * 1024 * 1024), 64 * 1024 * 1024))


def _pick_key_tile(T, n_head):
    # Tile the key/time axis only when T allows (last block dim must be a
    # multiple of 128 or span the whole array); keep the double-buffered decay
    # block (H, T, tile) bf16 under ~24 MiB.
    for cand in (512, 256, 128):
        if T > cand and T % cand == 0:
            w_blk_bytes = 2 * 2 * n_head * T * cand
            if w_blk_bytes <= 24 * 1024 * 1024:
                return cand
    return T


# ----------------------------------------------------------------------------
# Kernel #1: LayerNorm1 + RWKV_TimeMix + residual.
# grid = (B, num_key_tiles); key axis is a reduction ("arbitrary").
# Everything that depends on the key tile is computed in transposed layout
# (channels on sublanes, time on lanes) so MXU outputs are lane-dense.
# ----------------------------------------------------------------------------
def _timemix_kernel(x_ref, ln_g_ref, ln_b_ref, w_ref,
                    wkT_ref, bkT_ref, wvT_ref, bvT_ref, wrT_ref, brT_ref,
                    wo_ref, bo_ref, gamma_ref,
                    o_ref,
                    xs_sc, wkv_sc, sumk_sc, carry_sc,
                    *, n_head, head_size, key_tile, num_key_tiles, ln_eps):
    kj = pl.program_id(1)
    T, C = x_ref.shape
    A = n_head * head_size
    half = C // 2
    nt_dims = (((1,), (1,)), ((), ()))        # contract last dim with last dim

    # ---- once per batch element: LN1, time shift, accumulator init ----------
    @pl.when(kj == 0)
    def _init():
        x = x_ref[...]                                           # (T, C) f32
        mu = jnp.mean(x, axis=-1, keepdims=True)
        xc = x - mu
        var = jnp.mean(xc * xc, axis=-1, keepdims=True)
        xn = xc * lax.rsqrt(var + ln_eps) * ln_g_ref[...] + ln_b_ref[...]
        # time_shift on the first C//2 channels: shifted[t] = xn[t-1], row0 = 0
        shifted = jnp.concatenate(
            [jnp.zeros((1, C), xn.dtype), xn[:T - 1, :]], axis=0)
        col = lax.broadcasted_iota(jnp.int32, (T, C), 1)
        xs_sc[...] = jnp.where(col < half, shifted, xn)
        wkv_sc[...] = jnp.zeros_like(wkv_sc)
        carry_sc[...] = jnp.zeros_like(carry_sc)

    # ---- every key tile: K/V projection (transposed), sum_k scan, wkv -------
    start = pl.multiple_of(kj * key_tile, key_tile)
    xs_k = xs_sc[pl.ds(start, key_tile), :].astype(jnp.bfloat16)  # (TK, C)

    k_t = lax.dot_general(wkT_ref[...], xs_k, nt_dims,
                          preferred_element_type=jnp.float32) + bkT_ref[...]
    v_t = lax.dot_general(wvT_ref[...], xs_k, nt_dims,
                          preferred_element_type=jnp.float32) + bvT_ref[...]
    k_t = jnp.exp(jnp.clip(k_t, -60.0, 30.0))                     # (A, TK) f32

    # exact f32 inclusive prefix sum along the time axis (lanes), tile-local,
    # stitched across key tiles with a (A, 1) carry.  exp(k) can be huge, so
    # this stays in f32 on the VPU/XLU instead of a (multi-pass) f32 matmul.
    csum = k_t
    d = 1
    while d < key_tile:
        csum = csum + jnp.concatenate(
            [jnp.zeros((A, d), jnp.float32), csum[:, :key_tile - d]], axis=1)
        d *= 2
    sumk_sc[kj] = carry_sc[...] + csum
    carry_sc[...] += csum[:, key_tile - 1:key_tile]

    # per-head decay matmuls: (hs, TK) x (T, TK)^T -> (hs, T), lane-dense
    # output, accumulated into a static sublane-aligned slab of (A, T).
    kv_t = (k_t * v_t).astype(jnp.bfloat16)                       # (A, TK)
    for h in range(n_head):                                        # static unroll
        rs = slice(h * head_size, (h + 1) * head_size)
        wkv_sc[rs, :] += lax.dot_general(
            kv_t[rs, :], w_ref[h], nt_dims,
            preferred_element_type=jnp.float32)

    # ---- last key tile: receptance gate, output projection, residual --------
    @pl.when(kj == num_key_tiles - 1)
    def _finalize():
        xs_bf = xs_sc[...].astype(jnp.bfloat16)
        r_t = lax.dot_general(wrT_ref[...], xs_bf, nt_dims,
                              preferred_element_type=jnp.float32) + brT_ref[...]
        sig_r = jax.nn.sigmoid(r_t)                                # (A, T)
        for j in range(num_key_tiles):                             # static
            cs = slice(j * key_tile, (j + 1) * key_tile)
            inv = pl.reciprocal(sumk_sc[j], approx=True)           # EUP
            rwkv_j = (sig_r[:, cs] * wkv_sc[:, cs] * inv).astype(jnp.bfloat16)
            attn_j = lax.dot_general(
                rwkv_j, wo_ref[...], (((0,), (0,)), ((), ())),
                preferred_element_type=jnp.float32) + bo_ref[...]   # (TK, C)
            o_ref[cs, :] = x_ref[cs, :] + attn_j * gamma_ref[cs, :]


# ----------------------------------------------------------------------------
# Kernel #2: LayerNorm2 + RWKV_ChannelMix + residual.  grid = (B, T//TM).
# The 1-row time shift across tile boundaries uses a tiny per-tile
# "previous row" input built in the wrapper.
# ----------------------------------------------------------------------------
def _channelmix_kernel(x_ref, xb_ref, ln_g_ref, ln_b_ref,
                       wk_ref, bk_ref, wv_ref, bv_ref, wr_ref, br_ref,
                       ww_ref, bw_ref, o_ref, *, ln_eps):
    ti = pl.program_id(1)
    TM, C = x_ref.shape
    half = C // 2

    def ln(v):
        mu = jnp.mean(v, axis=-1, keepdims=True)
        vc = v - mu
        var = jnp.mean(vc * vc, axis=-1, keepdims=True)
        return vc * lax.rsqrt(var + ln_eps) * ln_g_ref[...] + ln_b_ref[...]

    x = x_ref[...]                                                 # (TM, C) f32
    xn = ln(x)
    prev = ln(xb_ref[...])                                         # (1, C)
    prev = jnp.where(ti == 0, 0.0, prev)   # global row 0 shifts in zeros
    shifted = jnp.concatenate([prev, xn[:TM - 1, :]], axis=0)
    col = lax.broadcasted_iota(jnp.int32, (TM, C), 1)
    xs = jnp.where(col < half, shifted, xn).astype(jnp.bfloat16)

    k = jnp.dot(xs, wk_ref[...], preferred_element_type=jnp.float32) + bk_ref[...]
    v = jnp.dot(xs, wv_ref[...], preferred_element_type=jnp.float32) + bv_ref[...]
    r = jnp.dot(xs, wr_ref[...], preferred_element_type=jnp.float32) + br_ref[...]

    # mish(k) = k * tanh(softplus(k)) = k * e^k(e^k+2) / (e^k(e^k+2)+2):
    # one exp + one approx reciprocal instead of exp+log1p+tanh on the EUP.
    kc = jnp.minimum(k, 20.0)                    # mish(k) ~= k for k > 20
    ek = jnp.exp(kc)
    num = ek * (ek + 2.0)
    mish_k = jnp.where(k > 20.0, k,
                       k * num * pl.reciprocal(num + 2.0, approx=True))
    mish_kv = (mish_k * v).astype(jnp.bfloat16)
    wkv = jnp.dot(mish_kv, ww_ref[...],
                  preferred_element_type=jnp.float32) + bw_ref[...]
    o_ref[...] = x + jax.nn.sigmoid(r) * wkv


# ----------------------------------------------------------------------------
# Wrappers
# ----------------------------------------------------------------------------
def rwkv_timemix(x, ln_g, ln_b, w_mat, Wk, bk, Wv, bv, Wr, br, Wo, bo, gamma,
                 *, n_head, head_size, ln_eps=1e-6):
    B, T, C = x.shape
    A = n_head * head_size
    n_embd = Wo.shape[1]
    key_tile = _pick_key_tile(T, n_head)
    nk = T // key_tile

    bf = lambda a: a.astype(jnp.bfloat16)
    # transposed weights / column biases so every per-tile matmul is an NT dot
    # with a lane-dense (*, time) output
    WkT, WvT, WrT = bf(Wk.T), bf(Wv.T), bf(Wr.T)
    bkT, bvT, brT = bk.reshape(A, 1), bv.reshape(A, 1), br.reshape(A, 1)

    kernel = functools.partial(_timemix_kernel, n_head=n_head,
                               head_size=head_size, key_tile=key_tile,
                               num_key_tiles=nk, ln_eps=ln_eps)
    const = lambda shape: pl.BlockSpec(shape,
                                       lambda b, k, _n=len(shape): (0,) * _n)

    vmem_est = (2 * (T * C * 4 + n_head * T * key_tile * 2
                     + 3 * A * C * 2 + A * n_embd * 2 + T * n_embd * 4)
                + (T * C + 2 * A * T + A) * 4)

    return pl.pallas_call(
        kernel,
        out_shape=jax.ShapeDtypeStruct((B, T, n_embd), jnp.float32),
        grid=(B, nk),
        in_specs=[
            pl.BlockSpec((None, T, C), lambda b, k: (b, 0, 0)),          # x
            const((1, C)), const((1, C)),                                # LN1
            pl.BlockSpec((n_head, T, key_tile), lambda b, k: (0, 0, k)), # decay
            const((A, C)), const((A, 1)),                                # key^T
            const((A, C)), const((A, 1)),                                # value^T
            const((A, C)), const((A, 1)),                                # recept^T
            const((A, n_embd)), const((1, n_embd)),                      # output
            const((T, 1)),                                               # gamma
        ],
        out_specs=pl.BlockSpec((None, T, n_embd), lambda b, k: (b, 0, 0)),
        scratch_shapes=[
            pltpu.VMEM((T, C), jnp.float32),              # xs (shifted, normed)
            pltpu.VMEM((A, T), jnp.float32),              # wkv accumulator (T on lanes)
            pltpu.VMEM((nk, A, key_tile), jnp.float32),   # per-tile sum_k
            pltpu.VMEM((A, 1), jnp.float32),              # sum_k carry
        ],
        compiler_params=pltpu.CompilerParams(
            dimension_semantics=("parallel", "arbitrary"),
            vmem_limit_bytes=_clamp_vmem(vmem_est)),
    )(x, ln_g, ln_b, bf(w_mat), WkT, bkT, WvT, bvT, WrT, brT, bf(Wo), bo, gamma)


def rwkv_channelmix(x, ln_g, ln_b, Wk, bk, Wv, bv, Wr, br, Ww, bw,
                    *, ln_eps=1e-6, t_tile=256):
    B, T, C = x.shape
    Fh = Wk.shape[1]
    TM = t_tile if (T > t_tile and T % t_tile == 0) else T
    nt = T // TM

    # one "previous row" per T-tile (zero row for the very first tile)
    if nt > 1:
        prev_rows = x[:, TM - 1:T - 1:TM, :]                    # (B, nt-1, C)
        boundary = jnp.concatenate(
            [jnp.zeros((B, 1, C), x.dtype), prev_rows], axis=1)
    else:
        boundary = jnp.zeros((B, 1, C), x.dtype)
    boundary = boundary[:, :, None, :]                          # (B, nt, 1, C)

    bf = lambda a: a.astype(jnp.bfloat16)
    kernel = functools.partial(_channelmix_kernel, ln_eps=ln_eps)
    const = lambda shape: pl.BlockSpec(shape,
                                       lambda b, t, _n=len(shape): (0,) * _n)

    vmem_est = (2 * (2 * TM * C * 4 + C * 4
                     + (2 * C * Fh + C * C + Fh * C) * 2)
                + 4 * TM * Fh * 4)

    return pl.pallas_call(
        kernel,
        out_shape=jax.ShapeDtypeStruct((B, T, C), jnp.float32),
        grid=(B, nt),
        in_specs=[
            pl.BlockSpec((None, TM, C), lambda b, t: (b, t, 0)),          # x tile
            pl.BlockSpec((None, None, 1, C), lambda b, t: (b, t, 0, 0)),  # prev row
            const((1, C)), const((1, C)),                                 # LN2
            const((C, Fh)), const((1, Fh)),                               # key
            const((C, Fh)), const((1, Fh)),                               # value
            const((C, C)), const((1, C)),                                 # receptance
            const((Fh, C)), const((1, C)),                                # weight
        ],
        out_specs=pl.BlockSpec((None, TM, C), lambda b, t: (b, t, 0)),
        compiler_params=pltpu.CompilerParams(
            dimension_semantics=("parallel", "parallel"),
            vmem_limit_bytes=_clamp_vmem(vmem_est)),
    )(x, boundary, ln_g, ln_b, bf(Wk), bk, bf(Wv), bv, bf(Wr), br, bf(Ww), bw)


def rwkv_block(x, p, *, ctx_len, n_head, head_size):
    """Full RWKVBlock forward (model_type='RWKV', drop_path=0, no layer scale)."""
    # TODO(synk): DropPath (stochastic depth) is identity here (drop_path=0.0).
    B, T, C = x.shape
    w_mat = build_w_matrix(p['time_w'], p['time_alpha'], p['time_beta'],
                           T, ctx_len, n_head)
    gamma_T = p['time_gamma'][:T, :]
    y = rwkv_timemix(x, p['ln1_g'], p['ln1_b'], w_mat,
                     p['att_Wk'], p['att_bk'], p['att_Wv'], p['att_bv'],
                     p['att_Wr'], p['att_br'], p['att_Wo'], p['att_bo'],
                     gamma_T, n_head=n_head, head_size=head_size)
    z = rwkv_channelmix(y, p['ln2_g'], p['ln2_b'],
                        p['mlp_Wk'], p['mlp_bk'], p['mlp_Wv'], p['mlp_bv'],
                        p['mlp_Wr'], p['mlp_br'], p['mlp_Ww'], p['mlp_bw'])
    return z


# ----------------------------------------------------------------------------
# Parameter setup (mirrors the module's __init__) + pure-JAX f32 reference
# ----------------------------------------------------------------------------
def make_time_w(n_head, ctx_len):
    curve = jnp.asarray([-(ctx_len - 1 - i) for i in range(ctx_len)],
                        dtype=jnp.float32)
    rows = []
    for h in range(n_head):
        if h < n_head - 1:
            decay = math.pow(ctx_len, -(h + 1) / (n_head - 1))
        else:
            decay = 0.0
        rows.append(jnp.exp(curve * decay))
    return jnp.stack(rows, axis=0)                              # (H, TT)


def build_w_matrix(time_w, time_alpha, time_beta, T, ctx_len, n_head):
    TT = ctx_len
    w = jnp.pad(time_w, ((0, 0), (0, TT)))                      # (H, 2TT)
    w = jnp.tile(w, (1, TT))                                    # (H, 2TT*TT)
    w = w[:, :-TT].reshape(n_head, TT, 2 * TT - 1)
    w = w[:, :, TT - 1:]
    return w[:, :T, :T] * time_alpha[:, :, :T] * time_beta[:, :T, :]


def _layer_norm_ref(x, g, b, eps=1e-6):
    mu = jnp.mean(x, axis=-1, keepdims=True)
    var = jnp.mean((x - mu) ** 2, axis=-1, keepdims=True)
    return (x - mu) / jnp.sqrt(var + eps) * g + b


def _timemix_ref(x, time_w, time_alpha, time_beta, time_gamma,
                 Wk, bk, Wv, bv, Wr, br, Wo, bo,
                 *, ctx_len, n_head, head_size):
    B, T, C = x.shape
    w = build_w_matrix(time_w, time_alpha, time_beta, T, ctx_len, n_head)
    half = C // 2
    shifted = jnp.concatenate(
        [jnp.zeros((B, 1, half), x.dtype), x[:, :-1, :half]], axis=1)
    xs = jnp.concatenate([shifted, x[:, :, half:]], axis=-1)
    k = xs @ Wk + bk
    v = xs @ Wv + bv
    r = xs @ Wr + br
    k = jnp.exp(jnp.clip(k, -60.0, 30.0))
    sum_k = jnp.cumsum(k, axis=1)
    kv = (k * v).reshape(B, T, n_head, head_size)
    wkv = jnp.einsum('htu,buhc->bthc', w, kv).reshape(B, T, -1)
    rwkv = jax.nn.sigmoid(r) * wkv / sum_k
    return (rwkv @ Wo + bo) * time_gamma[:T, :]


def _channelmix_ref(x, Wk, bk, Wv, bv, Wr, br, Ww, bw):
    B, T, C = x.shape
    half = C // 2
    shifted = jnp.concatenate(
        [jnp.zeros((B, 1, half), x.dtype), x[:, :-1, :half]], axis=1)
    xs = jnp.concatenate([shifted, x[:, :, half:]], axis=-1)
    k = xs @ Wk + bk
    v = xs @ Wv + bv
    r = xs @ Wr + br
    mish_k = k * jnp.tanh(jax.nn.softplus(k))
    wkv = (mish_k * v) @ Ww + bw
    return jax.nn.sigmoid(r) * wkv


def rwkv_block_ref(x, p, *, ctx_len, n_head, head_size):
    y = x + _timemix_ref(_layer_norm_ref(x, p['ln1_g'], p['ln1_b']),
                         p['time_w'], p['time_alpha'], p['time_beta'],
                         p['time_gamma'],
                         p['att_Wk'], p['att_bk'], p['att_Wv'], p['att_bv'],
                         p['att_Wr'], p['att_br'], p['att_Wo'], p['att_bo'],
                         ctx_len=ctx_len, n_head=n_head, head_size=head_size)
    z = y + _channelmix_ref(_layer_norm_ref(y, p['ln2_g'], p['ln2_b']),
                            p['mlp_Wk'], p['mlp_bk'], p['mlp_Wv'], p['mlp_bv'],
                            p['mlp_Wr'], p['mlp_br'], p['mlp_Ww'], p['mlp_bw'])
    return z


if __name__ == "__main__":
    # small shapes consistent with the module
    B, T = 2, 8
    n_embd, n_attn, n_head, ctx_len, mlp_ratio = 32, 32, 4, 16, 4
    head_size = n_attn // n_head
    n_ffn = n_embd * mlp_ratio

    key = jax.random.PRNGKey(0)
    ks = iter(jax.random.split(key, 32))

    def nrm(shape, s=0.1):
        return s * jax.random.normal(next(ks), shape, jnp.float32)

    x = jax.random.normal(next(ks), (B, T, n_embd), jnp.float32)

    params = dict(
        ln1_g=jnp.ones((1, n_embd), jnp.float32),
        ln1_b=jnp.zeros((1, n_embd), jnp.float32),
        ln2_g=jnp.ones((1, n_embd), jnp.float32),
        ln2_b=jnp.zeros((1, n_embd), jnp.float32),
        # RWKV_TimeMix time parameters (init as in __init__, lightly perturbed)
        time_w=make_time_w(n_head, ctx_len),
        time_alpha=jnp.ones((n_head, 1, ctx_len), jnp.float32)
                   + nrm((n_head, 1, ctx_len)),
        time_beta=jnp.ones((n_head, ctx_len, 1), jnp.float32)
                  + nrm((n_head, ctx_len, 1)),
        time_gamma=jnp.ones((ctx_len, 1), jnp.float32) + nrm((ctx_len, 1)),
        att_Wk=nrm((n_embd, n_attn)), att_bk=nrm((1, n_attn)),
        att_Wv=nrm((n_embd, n_attn)), att_bv=nrm((1, n_attn)),
        att_Wr=nrm((n_embd, n_attn)), att_br=nrm((1, n_attn)),
        att_Wo=nrm((n_attn, n_embd)), att_bo=nrm((1, n_embd)),
        mlp_Wk=nrm((n_embd, n_ffn)), mlp_bk=nrm((1, n_ffn)),
        mlp_Wv=nrm((n_embd, n_ffn)), mlp_bv=nrm((1, n_ffn)),
        mlp_Wr=nrm((n_embd, n_embd)), mlp_br=nrm((1, n_embd)),
        mlp_Ww=nrm((n_ffn, n_embd)), mlp_bw=nrm((1, n_embd)),
    )

    out = rwkv_block(x, params, ctx_len=ctx_len, n_head=n_head,
                     head_size=head_size)
    out = jax.block_until_ready(out)

    ref = rwkv_block_ref(x, params, ctx_len=ctx_len, n_head=n_head,
                         head_size=head_size)

    assert out.shape == (B, T, n_embd)
    err = float(jnp.max(jnp.abs(out - ref)))
    # kernel uses bf16 MXU operands + approx reciprocals; reference is all-f32
    assert jnp.allclose(out, ref, rtol=2e-2, atol=2e-2), f"max abs err {err}"
    print("KERNEL_OK")
</pallas_src>

<mosaic_0001>
module attributes {stable_mosaic.version = 11 : i64} {
  func.func @_timemix_kernel(%arg0: i32, %arg1: i32, %arg2: memref<1x8x32xf32, #tpu.memory_space<vmem>>, %arg3: memref<1x32xf32, #tpu.memory_space<vmem>>, %arg4: memref<1x32xf32, #tpu.memory_space<vmem>>, %arg5: memref<4x8x8xbf16, #tpu.memory_space<vmem>>, %arg6: memref<32x32xbf16, #tpu.memory_space<vmem>>, %arg7: memref<32x1xf32, #tpu.memory_space<vmem>>, %arg8: memref<32x32xbf16, #tpu.memory_space<vmem>>, %arg9: memref<32x1xf32, #tpu.memory_space<vmem>>, %arg10: memref<32x32xbf16, #tpu.memory_space<vmem>>, %arg11: memref<32x1xf32, #tpu.memory_space<vmem>>, %arg12: memref<32x32xbf16, #tpu.memory_space<vmem>>, %arg13: memref<1x32xf32, #tpu.memory_space<vmem>>, %arg14: memref<8x1xf32, #tpu.memory_space<vmem>>, %arg15: memref<1x8x32xf32, #tpu.memory_space<vmem>>, %arg16: memref<8x32xf32, #tpu.memory_space<vmem>>, %arg17: memref<32x8xf32, #tpu.memory_space<vmem>>, %arg18: memref<1x32x8xf32, #tpu.memory_space<vmem>>, %arg19: memref<32x1xf32, #tpu.memory_space<vmem>>) attributes {dimension_semantics = [#tpu.dimension_semantics<parallel>, #tpu.dimension_semantics<arbitrary>], iteration_bounds = array<i64: 2, 1>, scalar_prefetch = 0 : i64, scratch_operands = 4 : i64, tpu.core_type = #tpu.core_type<tc>, window_params = [{transform_indices = @transform_0, window_bounds = array<i64: 1, 8, 32>}, {pipeline_mode = #tpu.pipeline_mode<synchronous>, transform_indices = @transform_1, window_bounds = array<i64: 1, 32>}, {pipeline_mode = #tpu.pipeline_mode<synchronous>, transform_indices = @transform_2, window_bounds = array<i64: 1, 32>}, {transform_indices = @transform_3, window_bounds = array<i64: 4, 8, 8>}, {pipeline_mode = #tpu.pipeline_mode<synchronous>, transform_indices = @transform_4, window_bounds = array<i64: 32, 32>}, {pipeline_mode = #tpu.pipeline_mode<synchronous>, transform_indices = @transform_5, window_bounds = array<i64: 32, 1>}, {pipeline_mode = #tpu.pipeline_mode<synchronous>, transform_indices = @transform_6, window_bounds = array<i64: 32, 32>}, {pipeline_mode = #tpu.pipeline_mode<synchronous>, transform_indices = @transform_7, window_bounds = array<i64: 32, 1>}, {pipeline_mode = #tpu.pipeline_mode<synchronous>, transform_indices = @transform_8, window_bounds = array<i64: 32, 32>}, {pipeline_mode = #tpu.pipeline_mode<synchronous>, transform_indices = @transform_9, window_bounds = array<i64: 32, 1>}, {pipeline_mode = #tpu.pipeline_mode<synchronous>, transform_indices = @transform_10, window_bounds = array<i64: 32, 32>}, {pipeline_mode = #tpu.pipeline_mode<synchronous>, transform_indices = @transform_11, window_bounds = array<i64: 1, 32>}, {pipeline_mode = #tpu.pipeline_mode<synchronous>, transform_indices = @transform_12, window_bounds = array<i64: 8, 1>}, {transform_indices = @transform_13, window_bounds = array<i64: 1, 8, 32>}]} {
    %c0_i32 = arith.constant 0 : i32
    %0 = arith.cmpi eq, %arg1, %c0_i32 : i32
    %1 = arith.extui %0 : i1 to i32
    %c0_i32_0 = arith.constant 0 : i32
    %2 = arith.cmpi ne, %1, %c0_i32_0 : i32
    scf.if %2 {
      %c0_51 = arith.constant 0 : index
      %c0_52 = arith.constant 0 : index
      %c0_53 = arith.constant 0 : index
      %79 = vector.load %arg2[%c0_51, %c0_52, %c0_53] : memref<1x8x32xf32, #tpu.memory_space<vmem>>, vector<1x8x32xf32>
      %80 = vector.shape_cast %79 : vector<1x8x32xf32> to vector<8x32xf32>
      %cst_54 = arith.constant dense<0.000000e+00> : vector<8xf32>
      %81 = vector.multi_reduction <add>, %80, %cst_54 [1] : vector<8x32xf32> to vector<8xf32>
      %82 = vector.shape_cast %81 : vector<8xf32> to vector<8x1xf32>
      %cst_55 = arith.constant 3.200000e+01 : f32
      %83 = vector.broadcast %cst_55 : f32 to vector<8x1xf32>
      %84 = arith.divf %82, %83 : vector<8x1xf32>
      %85 = vector.broadcast %84 : vector<8x1xf32> to vector<8x32xf32>
      %86 = arith.subf %80, %85 : vector<8x32xf32>
      %87 = arith.mulf %86, %86 : vector<8x32xf32>
      %cst_56 = arith.constant dense<0.000000e+00> : vector<8xf32>
      %88 = vector.multi_reduction <add>, %87, %cst_56 [1] : vector<8x32xf32> to vector<8xf32>
      %89 = vector.shape_cast %88 : vector<8xf32> to vector<8x1xf32>
      %cst_57 = arith.constant 3.200000e+01 : f32
      %90 = vector.broadcast %cst_57 : f32 to vector<8x1xf32>
      %91 = arith.divf %89, %90 : vector<8x1xf32>
      %cst_58 = arith.constant 9.99999997E-7 : f32
      %92 = vector.broadcast %cst_58 : f32 to vector<8x1xf32>
      %93 = arith.addf %91, %92 : vector<8x1xf32>
      %94 = math.rsqrt %93 : vector<8x1xf32>
      %95 = vector.broadcast %94 : vector<8x1xf32> to vector<8x32xf32>
      %96 = arith.mulf %86, %95 : vector<8x32xf32>
      %c0_59 = arith.constant 0 : index
      %c0_60 = arith.constant 0 : index
      %97 = vector.load %arg3[%c0_59, %c0_60] : memref<1x32xf32, #tpu.memory_space<vmem>>, vector<1x32xf32>
      %98 = vector.broadcast %97 : vector<1x32xf32> to vector<8x32xf32>
      %99 = arith.mulf %96, %98 : vector<8x32xf32>
      %c0_61 = arith.constant 0 : index
      %c0_62 = arith.constant 0 : index
      %100 = vector.load %arg4[%c0_61, %c0_62] : memref<1x32xf32, #tpu.memory_space<vmem>>, vector<1x32xf32>
      %101 = vector.broadcast %100 : vector<1x32xf32> to vector<8x32xf32>
      %102 = arith.addf %99, %101 : vector<8x32xf32>
      %cst_63 = arith.constant 0.000000e+00 : f32
      %103 = vector.broadcast %cst_63 : f32 to vector<1x32xf32>
      %104 = vector.extract_strided_slice %102 {offsets = [0, 0], sizes = [7, 32], strides = [1, 1]} : vector<8x32xf32> to vector<7x32xf32>
      %105 = tpu.concatenate %103, %104 in 0 : vector<1x32xf32>, vector<7x32xf32> -> vector<8x32xf32>
      %106 = tpu.iota {dimensions = array<i32: 1>} : vector<8x32xi32>
      %c16_i32 = arith.constant 16 : i32
      %107 = vector.broadcast %c16_i32 : i32 to vector<8x32xi32>
      %108 = arith.cmpi slt, %106, %107 : vector<8x32xi32>
      %109 = arith.select %108, %105, %102 : vector<8x32xi1>, vector<8x32xf32>
      %c0_64 = arith.constant 0 : index
      %c0_65 = arith.constant 0 : index
      %110 = vector.load %arg16[%c0_64, %c0_65] : memref<8x32xf32, #tpu.memory_space<vmem>>, vector<8x32xf32>
      tpu.vector_store %arg16[%c0_64, %c0_65], %109 {strides = array<i32>} : memref<8x32xf32, #tpu.memory_space<vmem>>, vector<8x32xf32>,
      %cst_66 = arith.constant 0.000000e+00 : f32
      %111 = vector.broadcast %cst_66 : f32 to vector<32x8xf32>
      %c0_67 = arith.constant 0 : index
      %c0_68 = arith.constant 0 : index
      %112 = vector.load %arg17[%c0_67, %c0_68] : memref<32x8xf32, #tpu.memory_space<vmem>>, vector<32x8xf32>
      tpu.vector_store %arg17[%c0_67, %c0_68], %111 {strides = array<i32>} : memref<32x8xf32, #tpu.memory_space<vmem>>, vector<32x8xf32>,
      %cst_69 = arith.constant 0.000000e+00 : f32
      %113 = vector.broadcast %cst_69 : f32 to vector<32x1xf32>
      %c0_70 = arith.constant 0 : index
      %c0_71 = arith.constant 0 : index
      %114 = vector.load %arg19[%c0_70, %c0_71] : memref<32x1xf32, #tpu.memory_space<vmem>>, vector<32x1xf32>
      tpu.vector_store %arg19[%c0_70, %c0_71], %113 {strides = array<i32>} : memref<32x1xf32, #tpu.memory_space<vmem>>, vector<32x1xf32>,
    } else {
    }
    %c8_i32 = arith.constant 8 : i32
    %3 = arith.muli %arg1, %c8_i32 : i32
    %4 = tpu.assume_multiple %3, 8 : i32
    %5 = arith.index_cast %4 : i32 to index
    %c0 = arith.constant 0 : index
    %6 = vector.load %arg16[%5, %c0] : memref<8x32xf32, #tpu.memory_space<vmem>>, vector<8x32xf32>
    %7 = arith.truncf %6 : vector<8x32xf32> to vector<8x32xbf16>
    %c0_1 = arith.constant 0 : index
    %c0_2 = arith.constant 0 : index
    %8 = vector.load %arg6[%c0_1, %c0_2] : memref<32x32xbf16, #tpu.memory_space<vmem>>, vector<32x32xbf16>
    %cst = arith.constant dense<0.000000e+00> : vector<32x8xf32>
    %9 = tpu.matmul %8, %7, %cst {dimension_numbers = #tpu.dot_dimension_numbers<[1], [1], [0], [0], [0, 0, 1, 0], [], []>} : vector<32x32xbf16>, vector<8x32xbf16>, vector<32x8xf32> -> vector<32x8xf32>
    %c0_3 = arith.constant 0 : index
    %c0_4 = arith.constant 0 : index
    %10 = vector.load %arg7[%c0_3, %c0_4] : memref<32x1xf32, #tpu.memory_space<vmem>>, vector<32x1xf32>
    %11 = vector.broadcast %10 : vector<32x1xf32> to vector<32x8xf32>
    %12 = arith.addf %9, %11 : vector<32x8xf32>
    %c0_5 = arith.constant 0 : index
    %c0_6 = arith.constant 0 : index
    %13 = vector.load %arg8[%c0_5, %c0_6] : memref<32x32xbf16, #tpu.memory_space<vmem>>, vector<32x32xbf16>
    %cst_7 = arith.constant dense<0.000000e+00> : vector<32x8xf32>
    %14 = tpu.matmul %13, %7, %cst_7 {dimension_numbers = #tpu.dot_dimension_numbers<[1], [1], [0], [0], [0, 0, 1, 0], [], []>} : vector<32x32xbf16>, vector<8x32xbf16>, vector<32x8xf32> -> vector<32x8xf32>
    %c0_8 = arith.constant 0 : index
    %c0_9 = arith.constant 0 : index
    %15 = vector.load %arg9[%c0_8, %c0_9] : memref<32x1xf32, #tpu.memory_space<vmem>>, vector<32x1xf32>
    %16 = vector.broadcast %15 : vector<32x1xf32> to vector<32x8xf32>
    %17 = arith.addf %14, %16 : vector<32x8xf32>
    %cst_10 = arith.constant -6.000000e+01 : f32
    %cst_11 = arith.constant 3.000000e+01 : f32
    %18 = vector.broadcast %cst_10 : f32 to vector<32x8xf32>
    %19 = arith.maximumf %18, %12 : vector<32x8xf32>
    %20 = vector.broadcast %cst_11 : f32 to vector<32x8xf32>
    %21 = arith.minimumf %20, %19 : vector<32x8xf32>
    %22 = math.exp %21 : vector<32x8xf32>
    %cst_12 = arith.constant 0.000000e+00 : f32
    %23 = vector.broadcast %cst_12 : f32 to vector<32x1xf32>
    %24 = vector.extract_strided_slice %22 {offsets = [0, 0], sizes = [32, 7], strides = [1, 1]} : vector<32x8xf32> to vector<32x7xf32>
    %25 = tpu.concatenate %23, %24 in 1 : vector<32x1xf32>, vector<32x7xf32> -> vector<32x8xf32>
    %26 = arith.addf %22, %25 : vector<32x8xf32>
    %cst_13 = arith.constant 0.000000e+00 : f32
    %27 = vector.broadcast %cst_13 : f32 to vector<32x2xf32>
    %28 = vector.extract_strided_slice %26 {offsets = [0, 0], sizes = [32, 6], strides = [1, 1]} : vector<32x8xf32> to vector<32x6xf32>
    %29 = tpu.concatenate %27, %28 in 1 : vector<32x2xf32>, vector<32x6xf32> -> vector<32x8xf32>
    %30 = arith.addf %26, %29 : vector<32x8xf32>
    %cst_14 = arith.constant 0.000000e+00 : f32
    %31 = vector.broadcast %cst_14 : f32 to vector<32x4xf32>
    %32 = vector.extract_strided_slice %30 {offsets = [0, 0], sizes = [32, 4], strides = [1, 1]} : vector<32x8xf32> to vector<32x4xf32>
    %33 = tpu.concatenate %31, %32 in 1 : vector<32x4xf32>, vector<32x4xf32> -> vector<32x8xf32>
    %34 = arith.addf %30, %33 : vector<32x8xf32>
    %c0_15 = arith.constant 0 : index
    %c0_16 = arith.constant 0 : index
    %35 = vector.load %arg19[%c0_15, %c0_16] : memref<32x1xf32, #tpu.memory_space<vmem>>, vector<32x1xf32>
    %36 = vector.broadcast %35 : vector<32x1xf32> to vector<32x8xf32>
    %37 = arith.addf %36, %34 : vector<32x8xf32>
    %38 = arith.index_cast %arg1 : i32 to index
    %c0_17 = arith.constant 0 : index
    %c0_18 = arith.constant 0 : index
    %39 = vector.load %arg18[%38, %c0_17, %c0_18] : memref<1x32x8xf32, #tpu.memory_space<vmem>>, vector<1x32x8xf32>
    %40 = vector.shape_cast %39 : vector<1x32x8xf32> to vector<32x8xf32>
    %41 = vector.shape_cast %37 : vector<32x8xf32> to vector<1x32x8xf32>
    tpu.vector_store %arg18[%38, %c0_17, %c0_18], %41 {strides = array<i32>} : memref<1x32x8xf32, #tpu.memory_space<vmem>>, vector<1x32x8xf32>,
    %c0_19 = arith.constant 0 : index
    %c0_20 = arith.constant 0 : index
    %42 = vector.load %arg19[%c0_19, %c0_20] : memref<32x1xf32, #tpu.memory_space<vmem>>, vector<32x1xf32>
    %43 = vector.extract_strided_slice %34 {offsets = [0, 7], sizes = [32, 1], strides = [1, 1]} : vector<32x8xf32> to vector<32x1xf32>
    %44 = arith.addf %42, %43 : vector<32x1xf32>
    %c0_21 = arith.constant 0 : index
    %c0_22 = arith.constant 0 : index
    %45 = vector.load %arg19[%c0_21, %c0_22] : memref<32x1xf32, #tpu.memory_space<vmem>>, vector<32x1xf32>
    tpu.vector_store %arg19[%c0_21, %c0_22], %44 {strides = array<i32>} : memref<32x1xf32, #tpu.memory_space<vmem>>, vector<32x1xf32>,
    %46 = arith.mulf %22, %17 : vector<32x8xf32>
    %47 = arith.truncf %46 : vector<32x8xf32> to vector<32x8xbf16>
    %c0_23 = arith.constant 0 : index
    %c0_24 = arith.constant 0 : index
    %48 = vector.load %arg17[%c0_23, %c0_24] : memref<32x8xf32, #tpu.memory_space<vmem>>, vector<8x8xf32>
    %49 = vector.extract_strided_slice %47 {offsets = [0, 0], sizes = [8, 8], strides = [1, 1]} : vector<32x8xbf16> to vector<8x8xbf16>
    %c0_25 = arith.constant 0 : index
    %c0_26 = arith.constant 0 : index
    %c0_27 = arith.constant 0 : index
    %50 = vector.load %arg5[%c0_25, %c0_26, %c0_27] : memref<4x8x8xbf16, #tpu.memory_space<vmem>>, vector<1x8x8xbf16>
    %51 = vector.shape_cast %50 : vector<1x8x8xbf16> to vector<8x8xbf16>
    %cst_28 = arith.constant dense<0.000000e+00> : vector<8x8xf32>
    %52 = tpu.matmul %49, %51, %cst_28 {dimension_numbers = #tpu.dot_dimension_numbers<[1], [1], [0], [0], [0, 0, 1, 0], [], []>} : vector<8x8xbf16>, vector<8x8xbf16>, vector<8x8xf32> -> vector<8x8xf32>
    %53 = arith.addf %48, %52 : vector<8x8xf32>
    %c0_29 = arith.constant 0 : index
    %c0_30 = arith.constant 0 : index
    %54 = vector.load %arg17[%c0_29, %c0_30] : memref<32x8xf32, #tpu.memory_space<vmem>>, vector<8x8xf32>
    tpu.vector_store %arg17[%c0_29, %c0_30], %53 {strides = array<i32>} : memref<32x8xf32, #tpu.memory_space<vmem>>, vector<8x8xf32>,
    %c8 = arith.constant 8 : index
    %c0_31 = arith.constant 0 : index
    %55 = vector.load %arg17[%c8, %c0_31] : memref<32x8xf32, #tpu.memory_space<vmem>>, vector<8x8xf32>
    %56 = vector.extract_strided_slice %47 {offsets = [8, 0], sizes = [8, 8], strides = [1, 1]} : vector<32x8xbf16> to vector<8x8xbf16>
    %c1 = arith.constant 1 : index
    %c0_32 = arith.constant 0 : index
    %c0_33 = arith.constant 0 : index
    %57 = vector.load %arg5[%c1, %c0_32, %c0_33] : memref<4x8x8xbf16, #tpu.memory_space<vmem>>, vector<1x8x8xbf16>
    %58 = vector.shape_cast %57 : vector<1x8x8xbf16> to vector<8x8xbf16>
    %cst_34 = arith.constant dense<0.000000e+00> : vector<8x8xf32>
    %59 = tpu.matmul %56, %58, %cst_34 {dimension_numbers = #tpu.dot_dimension_numbers<[1], [1], [0], [0], [0, 0, 1, 0], [], []>} : vector<8x8xbf16>, vector<8x8xbf16>, vector<8x8xf32> -> vector<8x8xf32>
    %60 = arith.addf %55, %59 : vector<8x8xf32>
    %c8_35 = arith.constant 8 : index
    %c0_36 = arith.constant 0 : index
    %61 = vector.load %arg17[%c8_35, %c0_36] : memref<32x8xf32, #tpu.memory_space<vmem>>, vector<8x8xf32>
    tpu.vector_store %arg17[%c8_35, %c0_36], %60 {strides = array<i32>} : memref<32x8xf32, #tpu.memory_space<vmem>>, vector<8x8xf32>,
    %c16 = arith.constant 16 : index
    %c0_37 = arith.constant 0 : index
    %62 = vector.load %arg17[%c16, %c0_37] : memref<32x8xf32, #tpu.memory_space<vmem>>, vector<8x8xf32>
    %63 = vector.extract_strided_slice %47 {offsets = [16, 0], sizes = [8, 8], strides = [1, 1]} : vector<32x8xbf16> to vector<8x8xbf16>
    %c2 = arith.constant 2 : index
    %c0_38 = arith.constant 0 : index
    %c0_39 = arith.constant 0 : index
    %64 = vector.load %arg5[%c2, %c0_38, %c0_39] : memref<4x8x8xbf16, #tpu.memory_space<vmem>>, vector<1x8x8xbf16>
    %65 = vector.shape_cast %64 : vector<1x8x8xbf16> to vector<8x8xbf16>
    %cst_40 = arith.constant dense<0.000000e+00> : vector<8x8xf32>
    %66 = tpu.matmul %63, %65, %cst_40 {dimension_numbers = #tpu.dot_dimension_numbers<[1], [1], [0], [0], [0, 0, 1, 0], [], []>} : vector<8x8xbf16>, vector<8x8xbf16>, vector<8x8xf32> -> vector<8x8xf32>
    %67 = arith.addf %62, %66 : vector<8x8xf32>
    %c16_41 = arith.constant 16 : index
    %c0_42 = arith.constant 0 : index
    %68 = vector.load %arg17[%c16_41, %c0_42] : memref<32x8xf32, #tpu.memory_space<vmem>>, vector<8x8xf32>
    tpu.vector_store %arg17[%c16_41, %c0_42], %67 {strides = array<i32>} : memref<32x8xf32, #tpu.memory_space<vmem>>, vector<8x8xf32>,
    %c24 = arith.constant 24 : index
    %c0_43 = arith.constant 0 : index
    %69 = vector.load %arg17[%c24, %c0_43] : memref<32x8xf32, #tpu.memory_space<vmem>>, vector<8x8xf32>
    %70 = vector.extract_strided_slice %47 {offsets = [24, 0], sizes = [8, 8], strides = [1, 1]} : vector<32x8xbf16> to vector<8x8xbf16>
    %c3 = arith.constant 3 : index
    %c0_44 = arith.constant 0 : index
    %c0_45 = arith.constant 0 : index
    %71 = vector.load %arg5[%c3, %c0_44, %c0_45] : memref<4x8x8xbf16, #tpu.memory_space<vmem>>, vector<1x8x8xbf16>
    %72 = vector.shape_cast %71 : vector<1x8x8xbf16> to vector<8x8xbf16>
    %cst_46 = arith.constant dense<0.000000e+00> : vector<8x8xf32>
    %73 = tpu.matmul %70, %72, %cst_46 {dimension_numbers = #tpu.dot_dimension_numbers<[1], [1], [0], [0], [0, 0, 1, 0], [], []>} : vector<8x8xbf16>, vector<8x8xbf16>, vector<8x8xf32> -> vector<8x8xf32>
    %74 = arith.addf %69, %73 : vector<8x8xf32>
    %c24_47 = arith.constant 24 : index
    %c0_48 = arith.constant 0 : index
    %75 = vector.load %arg17[%c24_47, %c0_48] : memref<32x8xf32, #tpu.memory_space<vmem>>, vector<8x8xf32>
    tpu.vector_store %arg17[%c24_47, %c0_48], %74 {strides = array<i32>} : memref<32x8xf32, #tpu.memory_space<vmem>>, vector<8x8xf32>,
    %c0_i32_49 = arith.constant 0 : i32
    %76 = arith.cmpi eq, %arg1, %c0_i32_49 : i32
    %77 = arith.extui %76 : i1 to i32
    %c0_i32_50 = arith.constant 0 : i32
    %78 = arith.cmpi ne, %77, %c0_i32_50 : i32
    scf.if %78 {
      %c0_51 = arith.constant 0 : index
      %c0_52 = arith.constant 0 : index
      %79 = vector.load %arg16[%c0_51, %c0_52] : memref<8x32xf32, #tpu.memory_space<vmem>>, vector<8x32xf32>
      %80 = arith.truncf %79 : vector<8x32xf32> to vector<8x32xbf16>
      %c0_53 = arith.constant 0 : index
      %c0_54 = arith.constant 0 : index
      %81 = vector.load %arg10[%c0_53, %c0_54] : memref<32x32xbf16, #tpu.memory_space<vmem>>, vector<32x32xbf16>
      %cst_55 = arith.constant dense<0.000000e+00> : vector<32x8xf32>
      %82 = tpu.matmul %81, %80, %cst_55 {dimension_numbers = #tpu.dot_dimension_numbers<[1], [1], [0], [0], [0, 0, 1, 0], [], []>} : vector<32x32xbf16>, vector<8x32xbf16>, vector<32x8xf32> -> vector<32x8xf32>
      %c0_56 = arith.constant 0 : index
      %c0_57 = arith.constant 0 : index
      %83 = vector.load %arg11[%c0_56, %c0_57] : memref<32x1xf32, #tpu.memory_space<vmem>>, vector<32x1xf32>
      %84 = vector.broadcast %83 : vector<32x1xf32> to vector<32x8xf32>
      %85 = arith.addf %82, %84 : vector<32x8xf32>
      %86 = arith.negf %85 : vector<32x8xf32>
      %87 = math.exp %86 : vector<32x8xf32>
      %cst_58 = arith.constant 1.000000e+00 : f32
      %88 = vector.broadcast %cst_58 : f32 to vector<32x8xf32>
      %89 = arith.addf %88, %87 : vector<32x8xf32>
      %90 = arith.divf %88, %89 : vector<32x8xf32>
      %c0_59 = arith.constant 0 : index
      %c0_60 = arith.constant 0 : index
      %c0_61 = arith.constant 0 : index
      %91 = vector.load %arg18[%c0_59, %c0_60, %c0_61] : memref<1x32x8xf32, #tpu.memory_space<vmem>>, vector<1x32x8xf32>
      %92 = vector.shape_cast %91 : vector<1x32x8xf32> to vector<32x8xf32>
      %93 = tpu.reciprocal %92 {approx = true} : vector<32x8xf32> -> vector<32x8xf32>
      %c0_62 = arith.constant 0 : index
      %c0_63 = arith.constant 0 : index
      %94 = vector.load %arg17[%c0_62, %c0_63] : memref<32x8xf32, #tpu.memory_space<vmem>>, vector<32x8xf32>
      %95 = arith.mulf %90, %94 : vector<32x8xf32>
      %96 = arith.mulf %95, %93 : vector<32x8xf32>
      %97 = arith.truncf %96 : vector<32x8xf32> to vector<32x8xbf16>
      %c0_64 = arith.constant 0 : index
      %c0_65 = arith.constant 0 : index
      %98 = vector.load %arg12[%c0_64, %c0_65] : memref<32x32xbf16, #tpu.memory_space<vmem>>, vector<32x32xbf16>
      %cst_66 = arith.constant dense<0.000000e+00> : vector<8x32xf32>
      %99 = tpu.matmul %97, %98, %cst_66 {dimension_numbers = #tpu.dot_dimension_numbers<[0], [0], [1], [1], [0, 1, 1, 1], [], []>} : vector<32x8xbf16>, vector<32x32xbf16>, vector<8x32xf32> -> vector<8x32xf32>
      %c0_67 = arith.constant 0 : index
      %c0_68 = arith.constant 0 : index
      %100 = vector.load %arg13[%c0_67, %c0_68] : memref<1x32xf32, #tpu.memory_space<vmem>>, vector<1x32xf32>
      %101 = vector.broadcast %100 : vector<1x32xf32> to vector<8x32xf32>
      %102 = arith.addf %99, %101 : vector<8x32xf32>
      %c0_69 = arith.constant 0 : index
      %c0_70 = arith.constant 0 : index
      %c0_71 = arith.constant 0 : index
      %103 = vector.load %arg2[%c0_69, %c0_70, %c0_71] : memref<1x8x32xf32, #tpu.memory_space<vmem>>, vector<1x8x32xf32>
      %104 = vector.shape_cast %103 : vector<1x8x32xf32> to vector<8x32xf32>
      %c0_72 = arith.constant 0 : index
      %c0_73 = arith.constant 0 : index
      %105 = vector.load %arg14[%c0_72, %c0_73] : memref<8x1xf32, #tpu.memory_space<vmem>>, vector<8x1xf32>
      %106 = vector.broadcast %105 : vector<8x1xf32> to vector<8x32xf32>
      %107 = arith.mulf %102, %106 : vector<8x32xf32>
      %108 = arith.addf %104, %107 : vector<8x32xf32>
      %c0_74 = arith.constant 0 : index
      %c0_75 = arith.constant 0 : index
      %c0_76 = arith.constant 0 : index
      %109 = vector.load %arg15[%c0_74, %c0_75, %c0_76] : memref<1x8x32xf32, #tpu.memory_space<vmem>>, vector<1x8x32xf32>
      %110 = vector.shape_cast %109 : vector<1x8x32xf32> to vector<8x32xf32>
      %111 = vector.shape_cast %108 : vector<8x32xf32> to vector<1x8x32xf32>
      tpu.vector_store %arg15[%c0_74, %c0_75, %c0_76], %111 {strides = array<i32>} : memref<1x8x32xf32, #tpu.memory_space<vmem>>, vector<1x8x32xf32>,
    } else {
    }
    return
  }
  func.func @transform_0(%arg0: i32, %arg1: i32) -> (i32, i32, i32) {
    %c0_i32 = arith.constant 0 : i32
    %c0_i32_0 = arith.constant 0 : i32
    %c0_i32_1 = arith.constant 0 : i32
    return %arg0, %c0_i32, %c0_i32_0 : i32, i32, i32
  }
  func.func @transform_1(%arg0: i32, %arg1: i32) -> (i32, i32) {
    %c0_i32 = arith.constant 0 : i32
    %c0_i32_0 = arith.constant 0 : i32
    %c0_i32_1 = arith.constant 0 : i32
    return %c0_i32, %c0_i32_0 : i32, i32
  }
  func.func @transform_2(%arg0: i32, %arg1: i32) -> (i32, i32) {
    %c0_i32 = arith.constant 0 : i32
    %c0_i32_0 = arith.constant 0 : i32
    %c0_i32_1 = arith.constant 0 : i32
    return %c0_i32, %c0_i32_0 : i32, i32
  }
  func.func @transform_3(%arg0: i32, %arg1: i32) -> (i32, i32, i32) {
    %c0_i32 = arith.constant 0 : i32
    %c0_i32_0 = arith.constant 0 : i32
    %c0_i32_1 = arith.constant 0 : i32
    return %c0_i32, %c0_i32_0, %arg1 : i32, i32, i32
  }
  func.func @transform_4(%arg0: i32, %arg1: i32) -> (i32, i32) {
    %c0_i32 = arith.constant 0 : i32
    %c0_i32_0 = arith.constant 0 : i32
    %c0_i32_1 = arith.constant 0 : i32
    return %c0_i32, %c0_i32_0 : i32, i32
  }
  func.func @transform_5(%arg0: i32, %arg1: i32) -> (i32, i32) {
    %c0_i32 = arith.constant 0 : i32
    %c0_i32_0 = arith.constant 0 : i32
    %c0_i32_1 = arith.constant 0 : i32
    return %c0_i32, %c0_i32_0 : i32, i32
  }
  func.func @transform_6(%arg0: i32, %arg1: i32) -> (i32, i32) {
    %c0_i32 = arith.constant 0 : i32
    %c0_i32_0 = arith.constant 0 : i32
    %c0_i32_1 = arith.constant 0 : i32
    return %c0_i32, %c0_i32_0 : i32, i32
  }
  func.func @transform_7(%arg0: i32, %arg1: i32) -> (i32, i32) {
    %c0_i32 = arith.constant 0 : i32
    %c0_i32_0 = arith.constant 0 : i32
    %c0_i32_1 = arith.constant 0 : i32
    return %c0_i32, %c0_i32_0 : i32, i32
  }
  func.func @transform_8(%arg0: i32, %arg1: i32) -> (i32, i32) {
    %c0_i32 = arith.constant 0 : i32
    %c0_i32_0 = arith.constant 0 : i32
    %c0_i32_1 = arith.constant 0 : i32
    return %c0_i32, %c0_i32_0 : i32, i32
  }
  func.func @transform_9(%arg0: i32, %arg1: i32) -> (i32, i32) {
    %c0_i32 = arith.constant 0 : i32
    %c0_i32_0 = arith.constant 0 : i32
    %c0_i32_1 = arith.constant 0 : i32
    return %c0_i32, %c0_i32_0 : i32, i32
  }
  func.func @transform_10(%arg0: i32, %arg1: i32) -> (i32, i32) {
    %c0_i32 = arith.constant 0 : i32
    %c0_i32_0 = arith.constant 0 : i32
    %c0_i32_1 = arith.constant 0 : i32
    return %c0_i32, %c0_i32_0 : i32, i32
  }
  func.func @transform_11(%arg0: i32, %arg1: i32) -> (i32, i32) {
    %c0_i32 = arith.constant 0 : i32
    %c0_i32_0 = arith.constant 0 : i32
    %c0_i32_1 = arith.constant 0 : i32
    return %c0_i32, %c0_i32_0 : i32, i32
  }
  func.func @transform_12(%arg0: i32, %arg1: i32) -> (i32, i32) {
    %c0_i32 = arith.constant 0 : i32
    %c0_i32_0 = arith.constant 0 : i32
    %c0_i32_1 = arith.constant 0 : i32
    return %c0_i32, %c0_i32_0 : i32, i32
  }
  func.func @transform_13(%arg0: i32, %arg1: i32) -> (i32, i32, i32) {
    %c0_i32 = arith.constant 0 : i32
    %c0_i32_0 = arith.constant 0 : i32
    %c0_i32_1 = arith.constant 0 : i32
    return %arg0, %c0_i32, %c0_i32_0 : i32, i32, i32
  }
}

</mosaic_0001>

<llo_original>
// kernel: tpu_custom_call.1
$region0: #{tpu_custom_call.1}
  #allocation0 [shape = 'u32[]', space=smem, size = 0x4, offset = 0x4, fixed_abs, tag = 'smem constant byte address 0x4 - core index']
  #allocation1 [shape = 'u32[144,128]{1,0:T(1,128)}', space=vmem, size = 0x12000, scoped, tag = 'internal scratch']
  #allocation2 [shape = 'f32[8,32]{1,0:T(8,128)}', space=vmem, size = 0x1000, scoped, tag = 'scratch operand']
  #allocation3 [shape = 'f32[32,8]{1,0:T(8,128)}', space=vmem, size = 0x4000, scoped, tag = 'scratch operand']
  #allocation4 [shape = 'f32[1,32,8]{2,1,0:T(8,128)}', space=vmem, size = 0x4000, scoped, tag = 'scratch operand']
  #allocation5 [shape = 'f32[32,1]{1,0:T(8,128)}', space=vmem, size = 0x4000, scoped, tag = 'scratch operand']
  %s0 = inlined_call_operand.vmem [shape: f32[2,8,32], index: 0, kind: input, shape index: {}]
  %s1 = inlined_call_operand.vmem [shape: f32[1,32], index: 1, kind: input, shape index: {}]
  %s2 = inlined_call_operand.vmem [shape: f32[1,32], index: 2, kind: input, shape index: {}]
  %s3 = inlined_call_operand.vmem [shape: bf16[4,8,8], index: 3, kind: input, shape index: {}]
  %s4 = inlined_call_operand.vmem [shape: bf16[32,32], index: 4, kind: input, shape index: {}]
  %s5 = inlined_call_operand.vmem [shape: f32[32,1], index: 5, kind: input, shape index: {}]
  %s6 = inlined_call_operand.vmem [shape: bf16[32,32], index: 6, kind: input, shape index: {}]
  %s7 = inlined_call_operand.vmem [shape: f32[32,1], index: 7, kind: input, shape index: {}]
  %s8 = inlined_call_operand.vmem [shape: bf16[32,32], index: 8, kind: input, shape index: {}]
  %s9 = inlined_call_operand.vmem [shape: f32[32,1], index: 9, kind: input, shape index: {}]
  %s10 = inlined_call_operand.vmem [shape: bf16[32,32], index: 10, kind: input, shape index: {}]
  %s11 = inlined_call_operand.vmem [shape: f32[1,32], index: 11, kind: input, shape index: {}]
  %s12 = inlined_call_operand.vmem [shape: f32[8,1], index: 12, kind: input, shape index: {}]
  %s13 = inlined_call_operand.hbm [shape: f32[2,8,32], index: 13, kind: output, shape index: {}]
  %s14 = sld [smem:[#allocation0]]
  $region93: #{tpu_custom_call.1} parent=0
    _
  %s16 = ssub.s32 1, %s14
  %s17 = scalar_select 0, %s16, %s14
  $region1: #{tpu_custom_call.1} parent=0
    #allocation6 [shape = 'u8[8192]{0}', space=vmem, size = 0x2000, scoped, tag = 'output window, operand 0']
    #allocation7 [shape = 's32[2]{0}', space=sflag, size = 0x8, scoped, tag = 'scoped memory for tpu_custom_call.1']
    %18 = vsyncpa [#allocation7], 0
    %s19 = scalar_lea.sflag [#allocation7], 1
    %20 = vsyncpa %s19, 0
    loop: start=0, step=1, limit=4
    $region2: #{tpu_custom_call.1} parent=1 // loop_pre_header
      _
    $region3: #{tpu_custom_call.1} parent=1 // loop_header
      %s22 = sphi 0, %s26
      %p23 = scmp.ge.s32.totalorder %s22, 4
      %s29 = sphi 0, %s41
      %s30 = sphi 0, %s37
      %s31 = sphi 0, %s29
      %s32 = sphi 0, %s30
      %s33 = sphi 0, %s31
      %s34 = sphi 0, %s32
      %s44 = sphi 0, %s46
      %s47 = sphi 0, %s44
      %s48 = sphi 0, %s47
      %s64 = sphi 0, %s48
      %s68 = sphi 0, %s68
      %s70 = sphi 0, %s68
      %s71 = sphi 0, %s70
      %s85 = sphi 0, %s71
      %s89 = sphi 0, %s89
      %s91 = sphi 0, %s89
      %s92 = sphi 0, %s91
      %s106 = sphi 0, %s92
      %s112 = sphi 0, %s114
      %s115 = sphi 0, %s112
      %s116 = sphi 0, %s115
      %s132 = sphi 0, %s116
      %s136 = sphi 0, %s136
      %s138 = sphi 0, %s136
      %s139 = sphi 0, %s138
      %s153 = sphi 0, %s139
      %s157 = sphi 0, %s157
      %s159 = sphi 0, %s157
      %s160 = sphi 0, %s159
      %s174 = sphi 0, %s160
      %s178 = sphi 0, %s178
      %s180 = sphi 0, %s178
      %s181 = sphi 0, %s180
      %s195 = sphi 0, %s181
      %s199 = sphi 0, %s199
      %s201 = sphi 0, %s199
      %s202 = sphi 0, %s201
      %s216 = sphi 0, %s202
      %s220 = sphi 0, %s220
      %s222 = sphi 0, %s220
      %s223 = sphi 0, %s222
      %s237 = sphi 0, %s223
      %s241 = sphi 0, %s241
      %s243 = sphi 0, %s241
      %s244 = sphi 0, %s243
      %s258 = sphi 0, %s244
      %s262 = sphi 0, %s262
      %s264 = sphi 0, %s262
      %s265 = sphi 0, %s264
      %s279 = sphi 0, %s265
      %s283 = sphi 0, %s283
      %s285 = sphi 0, %s283
      %s286 = sphi 0, %s285
      %s300 = sphi 0, %s286
      %s304 = sphi 0, %s304
      %s306 = sphi 0, %s304
      %s307 = sphi 0, %s306
      %s321 = sphi 0, %s307
      %s327 = sphi 0, %s329
      %s330 = sphi 0, %s327
      %s331 = sphi 0, %s330
      %s347 = sphi 0, %s331
    $region4: #{tpu_custom_call.1} parent=1 // loop_header_branch
      %25 = sbr.rel (%p23) target = $region8
    $region5: #{tpu_custom_call.1} parent=1 // loop_body
      %s27 = ssub.s32 %s22, 1
      %s28 = ssub.s32 %s22, 2
      %s35 = sadd.s32 1, %s30
      %p36 = scmp.ge.s32.totalorder %s35, 1
      %s37 = scalar_select %p36, 0, %s35
      %s38 = sadd.s32 1, %s29
      %s39 = scalar_select %p36, %s38, %s29
      %p40 = scmp.ge.s32.totalorder %s39, 2
      %s41 = scalar_select %p40, 0, %s39
      %s42 = ssub.s32 %s29, %s41
      %p43 = scmp.eq.s32.totalorder %s42, 0
      %s45 = sadd.s32 %s44, 1
      %s46 = scalar_select %p43, %s44, %s45
      %p49 = pneg %p43
      %p50 = scmp.eq.s32.totalorder %s22, 1
      %p51 = por %p49, %p50
      %p52 = scmp.ne.s32.totalorder %s44, %s47
      %p53 = scmp.eq.s32.totalorder %s22, 0
      %p54 = por %p52, %p53
      %p55 = scmp.ne.s32.totalorder %s44, %s47
      %p56 = scmp.eq.s32.totalorder %s27, 1
      %p57 = por %p55, %p56
      %p58 = scmp.ne.s32.totalorder %s47, %s48
      %p59 = scmp.eq.s32.totalorder %s27, 0
      %p60 = por %p58, %p59
      %p61 = scmp.ne.s32.totalorder %s47, %s48
      %p62 = scmp.eq.s32.totalorder %s28, 1
      %p63 = por %p61, %p62
      %p65 = scmp.ne.s32.totalorder %s48, %s64
      %p66 = scmp.eq.s32.totalorder %s28, 0
      %p67 = por %p65, %p66
      %s69 = sadd.s32 %s68, 1
      %p72 = scmp.eq.s32.totalorder %s22, 1
      %p73 = scmp.ne.s32.totalorder %s68, %s70
      %p74 = scmp.eq.s32.totalorder %s22, 0
      %p75 = por %p73, %p74
      %p76 = scmp.ne.s32.totalorder %s68, %s70
      %p77 = scmp.eq.s32.totalorder %s27, 1
      %p78 = por %p76, %p77
      %p79 = scmp.ne.s32.totalorder %s70, %s71
      %p80 = scmp.eq.s32.totalorder %s27, 0
      %p81 = por %p79, %p80
      %p82 = scmp.ne.s32.totalorder %s70, %s71
      %p83 = scmp.eq.s32.totalorder %s28, 1
      %p84 = por %p82, %p83
      %p86 = scmp.ne.s32.totalorder %s71, %s85
      %p87 = scmp.eq.s32.totalorder %s28, 0
      %p88 = por %p86, %p87
      %s90 = sadd.s32 %s89, 1
      %p93 = scmp.eq.s32.totalorder %s22, 1
      %p94 = scmp.ne.s32.totalorder %s89, %s91
      %p95 = scmp.eq.s32.totalorder %s22, 0
      %p96 = por %p94, %p95
      %p97 = scmp.ne.s32.totalorder %s89, %s91
      %p98 = scmp.eq.s32.totalorder %s27, 1
      %p99 = por %p97, %p98
      %p100 = scmp.ne.s32.totalorder %s91, %s92
      %p101 = scmp.eq.s32.totalorder %s27, 0
      %p102 = por %p100, %p101
      %p103 = scmp.ne.s32.totalorder %s91, %s92
      %p104 = scmp.eq.s32.totalorder %s28, 1
      %p105 = por %p103, %p104
      %p107 = scmp.ne.s32.totalorder %s92, %s106
      %p108 = scmp.eq.s32.totalorder %s28, 0
      %p109 = por %p107, %p108
      %s110 = ssub.s32 %s30, %s37
      %p111 = scmp.eq.s32.totalorder %s110, 0
      %s113 = sadd.s32 %s112, 1
      %s114 = scalar_select %p111, %s112, %s113
      %p117 = pneg %p111
      %p118 = scmp.eq.s32.totalorder %s22, 1
      %p119 = por %p117, %p118
      %p120 = scmp.ne.s32.totalorder %s112, %s115
      %p121 = scmp.eq.s32.totalorder %s22, 0
      %p122 = por %p120, %p121
      %p123 = scmp.ne.s32.totalorder %s112, %s115
      %p124 = scmp.eq.s32.totalorder %s27, 1
      %p125 = por %p123, %p124
      %p126 = scmp.ne.s32.totalorder %s115, %s116
      %p127 = scmp.eq.s32.totalorder %s27, 0
      %p128 = por %p126, %p127
      %p129 = scmp.ne.s32.totalorder %s115, %s116
      %p130 = scmp.eq.s32.totalorder %s28, 1
      %p131 = por %p129, %p130
      %p133 = scmp.ne.s32.totalorder %s116, %s132
      %p134 = scmp.eq.s32.totalorder %s28, 0
      %p135 = por %p133, %p134
      %s137 = sadd.s32 %s136, 1
      %p140 = scmp.eq.s32.totalorder %s22, 1
      %p141 = scmp.ne.s32.totalorder %s136, %s138
      %p142 = scmp.eq.s32.totalorder %s22, 0
      %p143 = por %p141, %p142
      %p144 = scmp.ne.s32.totalorder %s136, %s138
      %p145 = scmp.eq.s32.totalorder %s27, 1
      %p146 = por %p144, %p145
      %p147 = scmp.ne.s32.totalorder %s138, %s139
      %p148 = scmp.eq.s32.totalorder %s27, 0
      %p149 = por %p147, %p148
      %p150 = scmp.ne.s32.totalorder %s138, %s139
      %p151 = scmp.eq.s32.totalorder %s28, 1
      %p152 = por %p150, %p151
      %p154 = scmp.ne.s32.totalorder %s139, %s153
      %p155 = scmp.eq.s32.totalorder %s28, 0
      %p156 = por %p154, %p155
      %s158 = sadd.s32 %s157, 1
      %p161 = scmp.eq.s32.totalorder %s22, 1
      %p162 = scmp.ne.s32.totalorder %s157, %s159
      %p163 = scmp.eq.s32.totalorder %s22, 0
      %p164 = por %p162, %p163
      %p165 = scmp.ne.s32.totalorder %s157, %s159
      %p166 = scmp.eq.s32.totalorder %s27, 1
      %p167 = por %p165, %p166
      %p168 = scmp.ne.s32.totalorder %s159, %s160
      %p169 = scmp.eq.s32.totalorder %s27, 0
      %p170 = por %p168, %p169
      %p171 = scmp.ne.s32.totalorder %s159, %s160
      %p172 = scmp.eq.s32.totalorder %s28, 1
      %p173 = por %p171, %p172
      %p175 = scmp.ne.s32.totalorder %s160, %s174
      %p176 = scmp.eq.s32.totalorder %s28, 0
      %p177 = por %p175, %p176
      %s179 = sadd.s32 %s178, 1
      %p182 = scmp.eq.s32.totalorder %s22, 1
      %p183 = scmp.ne.s32.totalorder %s178, %s180
      %p184 = scmp.eq.s32.totalorder %s22, 0
      %p185 = por %p183, %p184
      %p186 = scmp.ne.s32.totalorder %s178, %s180
      %p187 = scmp.eq.s32.totalorder %s27, 1
      %p188 = por %p186, %p187
      %p189 = scmp.ne.s32.totalorder %s180, %s181
      %p190 = scmp.eq.s32.totalorder %s27, 0
      %p191 = por %p189, %p190
      %p192 = scmp.ne.s32.totalorder %s180, %s181
      %p193 = scmp.eq.s32.totalorder %s28, 1
      %p194 = por %p192, %p193
      %p196 = scmp.ne.s32.totalorder %s181, %s195
      %p197 = scmp.eq.s32.totalorder %s28, 0
      %p198 = por %p196, %p197
      %s200 = sadd.s32 %s199, 1
      %p203 = scmp.eq.s32.totalorder %s22, 1
      %p204 = scmp.ne.s32.totalorder %s199, %s201
      %p205 = scmp.eq.s32.totalorder %s22, 0
      %p206 = por %p204, %p205
      %p207 = scmp.ne.s32.totalorder %s199, %s201
      %p208 = scmp.eq.s32.totalorder %s27, 1
      %p209 = por %p207, %p208
      %p210 = scmp.ne.s32.totalorder %s201, %s202
      %p211 = scmp.eq.s32.totalorder %s27, 0
      %p212 = por %p210, %p211
      %p213 = scmp.ne.s32.totalorder %s201, %s202
      %p214 = scmp.eq.s32.totalorder %s28, 1
      %p215 = por %p213, %p214
      %p217 = scmp.ne.s32.totalorder %s202, %s216
      %p218 = scmp.eq.s32.totalorder %s28, 0
      %p219 = por %p217, %p218
      %s221 = sadd.s32 %s220, 1
      %p224 = scmp.eq.s32.totalorder %s22, 1
      %p225 = scmp.ne.s32.totalorder %s220, %s222
      %p226 = scmp.eq.s32.totalorder %s22, 0
      %p227 = por %p225, %p226
      %p228 = scmp.ne.s32.totalorder %s220, %s222
      %p229 = scmp.eq.s32.totalorder %s27, 1
      %p230 = por %p228, %p229
      %p231 = scmp.ne.s32.totalorder %s222, %s223
      %p232 = scmp.eq.s32.totalorder %s27, 0
      %p233 = por %p231, %p232
      %p234 = scmp.ne.s32.totalorder %s222, %s223
      %p235 = scmp.eq.s32.totalorder %s28, 1
      %p236 = por %p234, %p235
      %p238 = scmp.ne.s32.totalorder %s223, %s237
      %p239 = scmp.eq.s32.totalorder %s28, 0
      %p240 = por %p238, %p239
      %s242 = sadd.s32 %s241, 1
      %p245 = scmp.eq.s32.totalorder %s22, 1
      %p246 = scmp.ne.s32.totalorder %s241, %s243
      %p247 = scmp.eq.s32.totalorder %s22, 0
      %p248 = por %p246, %p247
      %p249 = scmp.ne.s32.totalorder %s241, %s243
      %p250 = scmp.eq.s32.totalorder %s27, 1
      %p251 = por %p249, %p250
      %p252 = scmp.ne.s32.totalorder %s243, %s244
      %p253 = scmp.eq.s32.totalorder %s27, 0
      %p254 = por %p252, %p253
      %p255 = scmp.ne.s32.totalorder %s243, %s244
      %p256 = scmp.eq.s32.totalorder %s28, 1
      %p257 = por %p255, %p256
      %p259 = scmp.ne.s32.totalorder %s244, %s258
      %p260 = scmp.eq.s32.totalorder %s28, 0
      %p261 = por %p259, %p260
      %s263 = sadd.s32 %s262, 1
      %p266 = scmp.eq.s32.totalorder %s22, 1
      %p267 = scmp.ne.s32.totalorder %s262, %s264
      %p268 = scmp.eq.s32.totalorder %s22, 0
      %p269 = por %p267, %p268
      %p270 = scmp.ne.s32.totalorder %s262, %s264
      %p271 = scmp.eq.s32.totalorder %s27, 1
      %p272 = por %p270, %p271
      %p273 = scmp.ne.s32.totalorder %s264, %s265
      %p274 = scmp.eq.s32.totalorder %s27, 0
      %p275 = por %p273, %p274
      %p276 = scmp.ne.s32.totalorder %s264, %s265
      %p277 = scmp.eq.s32.totalorder %s28, 1
      %p278 = por %p276, %p277
      %p280 = scmp.ne.s32.totalorder %s265, %s279
      %p281 = scmp.eq.s32.totalorder %s28, 0
      %p282 = por %p280, %p281
      %s284 = sadd.s32 %s283, 1
      %p287 = scmp.eq.s32.totalorder %s22, 1
      %p288 = scmp.ne.s32.totalorder %s283, %s285
      %p289 = scmp.eq.s32.totalorder %s22, 0
      %p290 = por %p288, %p289
      %p291 = scmp.ne.s32.totalorder %s283, %s285
      %p292 = scmp.eq.s32.totalorder %s27, 1
      %p293 = por %p291, %p292
      %p294 = scmp.ne.s32.totalorder %s285, %s286
      %p295 = scmp.eq.s32.totalorder %s27, 0
      %p296 = por %p294, %p295
      %p297 = scmp.ne.s32.totalorder %s285, %s286
      %p298 = scmp.eq.s32.totalorder %s28, 1
      %p299 = por %p297, %p298
      %p301 = scmp.ne.s32.totalorder %s286, %s300
      %p302 = scmp.eq.s32.totalorder %s28, 0
      %p303 = por %p301, %p302
      %s305 = sadd.s32 %s304, 1
      %p308 = scmp.eq.s32.totalorder %s22, 1
      %p309 = scmp.ne.s32.totalorder %s304, %s306
      %p310 = scmp.eq.s32.totalorder %s22, 0
      %p311 = por %p309, %p310
      %p312 = scmp.ne.s32.totalorder %s304, %s306
      %p313 = scmp.eq.s32.totalorder %s27, 1
      %p314 = por %p312, %p313
      %p315 = scmp.ne.s32.totalorder %s306, %s307
      %p316 = scmp.eq.s32.totalorder %s27, 0
      %p317 = por %p315, %p316
      %p318 = scmp.ne.s32.totalorder %s306, %s307
      %p319 = scmp.eq.s32.totalorder %s28, 1
      %p320 = por %p318, %p319
      %p322 = scmp.ne.s32.totalorder %s307, %s321
      %p323 = scmp.eq.s32.totalorder %s28, 0
      %p324 = por %p322, %p323
      %s325 = ssub.s32 %s29, %s41
      %p326 = scmp.eq.s32.totalorder %s325, 0
      %s328 = sadd.s32 %s327, 1
      %s329 = scalar_select %p326, %s327, %s328
      %p332 = pneg %p326
      %p333 = scmp.eq.s32.totalorder %s22, 1
      %p334 = por %p332, %p333
      %p335 = scmp.ne.s32.totalorder %s327, %s330
      %p336 = scmp.eq.s32.totalorder %s22, 0
      %p337 = por %p335, %p336
      %p338 = scmp.ne.s32.totalorder %s327, %s330
      %p339 = scmp.eq.s32.totalorder %s27, 1
      %p340 = por %p338, %p339
      %p341 = scmp.ne.s32.totalorder %s330, %s331
      %p342 = scmp.eq.s32.totalorder %s27, 0
      %p343 = por %p341, %p342
      %p344 = scmp.ne.s32.totalorder %s330, %s331
      %p345 = scmp.eq.s32.totalorder %s28, 1
      %p346 = por %p344, %p345
      %p348 = scmp.ne.s32.totalorder %s331, %s347
      %p349 = scmp.eq.s32.totalorder %s28, 0
      %p350 = por %p348, %p349
      %p351 = scmp.le.s32.totalorder 1, %s22
      %p352 = scmp.lt.s32.totalorder %s22, 3
      %p353 = pnand %p351, %p352
      %p354 = pneg %p353
      // Predicated region
      $region9: #{tpu_custom_call.1} parent=5 // pred_check
        _
      $region10: #{tpu_custom_call.1} parent=5 // pred_check_branch
        %356 = sbr.rel (%p353) target = $region12
      $region11: #{tpu_custom_call.1} parent=5 // pred_region
        %s357 = ssub.s32 %s22, 1
        // Predicated region
        $region13: #{tpu_custom_call.1} parent=11 // pred_check
          %p358 = pneg %p81
        $region14: #{tpu_custom_call.1} parent=11 // pred_check_branch
          %360 = sbr.rel (%p358) target = $region16
        $region15: #{tpu_custom_call.1} parent=11 // pred_region
          _
        $region16: #{tpu_custom_call.1} parent=11 // pred_fallthru
          _
        // Predicated region
        $region17: #{tpu_custom_call.1} parent=11 // pred_check
          %p361 = pneg %p102
        $region18: #{tpu_custom_call.1} parent=11 // pred_check_branch
          %363 = sbr.rel (%p361) target = $region20
        $region19: #{tpu_custom_call.1} parent=11 // pred_region
          _
        $region20: #{tpu_custom_call.1} parent=11 // pred_fallthru
          _
        // Predicated region
        $region21: #{tpu_custom_call.1} parent=11 // pred_check
          %p364 = pneg %p128
        $region22: #{tpu_custom_call.1} parent=11 // pred_check_branch
          %366 = sbr.rel (%p364) target = $region24
        $region23: #{tpu_custom_call.1} parent=11 // pred_region
          %p367 = scmp.lt.s32.totalorder %s32, 0
          %s368 = scalar_select %p367, %s32, 0
          %s369 = smul.addr %s368, 4
          %s370 = scalar_lea.vmem %s3, %s369
        $region24: #{tpu_custom_call.1} parent=11 // pred_fallthru
          _
        // Predicated region
        $region25: #{tpu_custom_call.1} parent=11 // pred_check
          %p371 = pneg %p149
        $region26: #{tpu_custom_call.1} parent=11 // pred_check_branch
          %373 = sbr.rel (%p371) target = $region28
        $region27: #{tpu_custom_call.1} parent=11 // pred_region
          _
        $region28: #{tpu_custom_call.1} parent=11 // pred_fallthru
          _
        // Predicated region
        $region29: #{tpu_custom_call.1} parent=11 // pred_check
          %p374 = pneg %p170
        $region30: #{tpu_custom_call.1} parent=11 // pred_check_branch
          %376 = sbr.rel (%p374) target = $region32
        $region31: #{tpu_custom_call.1} parent=11 // pred_region
          _
        $region32: #{tpu_custom_call.1} parent=11 // pred_fallthru
          _
        // Predicated region
        $region33: #{tpu_custom_call.1} parent=11 // pred_check
          %p377 = pneg %p191
        $region34: #{tpu_custom_call.1} parent=11 // pred_check_branch
          %379 = sbr.rel (%p377) target = $region36
        $region35: #{tpu_custom_call.1} parent=11 // pred_region
          _
        $region36: #{tpu_custom_call.1} parent=11 // pred_fallthru
          _
        // Predicated region
        $region37: #{tpu_custom_call.1} parent=11 // pred_check
          %p380 = pneg %p212
        $region38: #{tpu_custom_call.1} parent=11 // pred_check_branch
          %382 = sbr.rel (%p380) target = $region40
        $region39: #{tpu_custom_call.1} parent=11 // pred_region
          _
        $region40: #{tpu_custom_call.1} parent=11 // pred_fallthru
          _
        // Predicated region
        $region41: #{tpu_custom_call.1} parent=11 // pred_check
          %p383 = pneg %p233
        $region42: #{tpu_custom_call.1} parent=11 // pred_check_branch
          %385 = sbr.rel (%p383) target = $region44
        $region43: #{tpu_custom_call.1} parent=11 // pred_region
          _
        $region44: #{tpu_custom_call.1} parent=11 // pred_fallthru
          _
        // Predicated region
        $region45: #{tpu_custom_call.1} parent=11 // pred_check
          %p386 = pneg %p254
        $region46: #{tpu_custom_call.1} parent=11 // pred_check_branch
          %388 = sbr.rel (%p386) target = $region48
        $region47: #{tpu_custom_call.1} parent=11 // pred_region
          _
        $region48: #{tpu_custom_call.1} parent=11 // pred_fallthru
          _
        // Predicated region
        $region49: #{tpu_custom_call.1} parent=11 // pred_check
          %p389 = pneg %p275
        $region50: #{tpu_custom_call.1} parent=11 // pred_check_branch
          %391 = sbr.rel (%p389) target = $region52
        $region51: #{tpu_custom_call.1} parent=11 // pred_region
          _
        $region52: #{tpu_custom_call.1} parent=11 // pred_fallthru
          _
        // Predicated region
        $region53: #{tpu_custom_call.1} parent=11 // pred_check
          %p392 = pneg %p296
        $region54: #{tpu_custom_call.1} parent=11 // pred_check_branch
          %394 = sbr.rel (%p392) target = $region56
        $region55: #{tpu_custom_call.1} parent=11 // pred_region
          _
        $region56: #{tpu_custom_call.1} parent=11 // pred_fallthru
          _
        // Predicated region
        $region57: #{tpu_custom_call.1} parent=11 // pred_check
          %p395 = pneg %p317
        $region58: #{tpu_custom_call.1} parent=11 // pred_check_branch
          %397 = sbr.rel (%p395) target = $region60
        $region59: #{tpu_custom_call.1} parent=11 // pred_region
          _
        $region60: #{tpu_custom_call.1} parent=11 // pred_fallthru
          _
      $region12: #{tpu_custom_call.1} parent=5 // pred_fallthru
        _
      %p398 = scmp.lt.s32.totalorder %s22, 2
      // Predicated region
      $region61: #{tpu_custom_call.1} parent=5 // pred_check
        %p399 = pneg %p398
      $region62: #{tpu_custom_call.1} parent=5 // pred_check_branch
        %401 = sbr.rel (%p399) target = $region64
      $region63: #{tpu_custom_call.1} parent=5 // pred_region
        // Predicated region
        $region65: #{tpu_custom_call.1} parent=63 // pred_check
          %p402 = pneg %p54
        $region66: #{tpu_custom_call.1} parent=63 // pred_check_branch
          %404 = sbr.rel (%p402) target = $region68
        $region67: #{tpu_custom_call.1} parent=63 // pred_region
          %p405 = scmp.lt.s32.totalorder %s29, 1
          %s406 = scalar_select %p405, %s29, 1
          %s407 = smul.addr %s406, 8
          %s408 = scalar_lea.vmem %s0, %s407
        $region68: #{tpu_custom_call.1} parent=63 // pred_fallthru
          _
      $region64: #{tpu_custom_call.1} parent=5 // pred_fallthru
        _
      %p409 = scmp.le.s32.totalorder 1, %s22
      %p410 = scmp.lt.s32.totalorder %s22, 3
      %p411 = pnand %p409, %p410
      %p412 = pneg %p411
      // Predicated region
      $region69: #{tpu_custom_call.1} parent=5 // pred_check
        _
      $region70: #{tpu_custom_call.1} parent=5 // pred_check_branch
        %414 = sbr.rel (%p411) target = $region72
      $region71: #{tpu_custom_call.1} parent=5 // pred_region
        %s415 = ssub.s32 %s22, 1
        %p416 = scmp.lt.s32.totalorder %s31, 1
        %s417 = scalar_select %p416, %s31, 1
        %s418 = smul.addr %s417, 8
        %s419 = scalar_lea.vmem %s0, %s418
        %p420 = pneg %p60
        %p421 = pneg %p57
        %p422 = pneg %p81
        %p423 = pneg %p78
        %p424 = pneg %p102
        %p425 = pneg %p99
        %p426 = scmp.lt.s32.totalorder %s32, 0
        %s427 = scalar_select %p426, %s32, 0
        %s428 = smul.addr %s427, 4
        %s429 = scalar_lea.vmem %s3, %s428
        %p430 = pneg %p128
        %p431 = pneg %p125
        %p432 = pneg %p149
        %p433 = pneg %p146
        %p434 = pneg %p170
        %p435 = pneg %p167
        %p436 = pneg %p191
        %p437 = pneg %p188
        %p438 = pneg %p212
        %p439 = pneg %p209
        %p440 = pneg %p233
        %p441 = pneg %p230
        %p442 = pneg %p254
        %p443 = pneg %p251
        %p444 = pneg %p275
        %p445 = pneg %p272
        %p446 = pneg %p296
        %p447 = pneg %p293
        %p448 = pneg %p317
        %p449 = pneg %p314
        %p450 = pneg %p343
        %p451 = pneg %p340
        %s452 = sand.u32 %s330, 1
        %s453 = scalar_lea.sflag [#allocation7], %s452
        %s454 = sand.u32 %s330, 1
        %s455 = smul.addr %s454, 8
        %s456 = scalar_lea.vmem [#allocation6], %s455
        %p457 = scmp.lt.s32.totalorder %s31, 1
        %s458 = scalar_select %p457, %s31, 1
        %s459 = smul.addr %s458, 8
        %s460 = scalar_lea.vmem %s0, %s459
        %p461 = scmp.lt.s32.totalorder %s32, 0
        %s462 = scalar_select %p461, %s32, 0
        %s463 = smul.addr %s462, 4
        %s464 = scalar_lea.vmem %s3, %s463
        %p466 = scmp.eq.s32.totalorder %s32, 0
        // Predicated region
        $region73: #{tpu_custom_call.1} parent=71 // pred_check
          %p467 = pneg %p466
        $region74: #{tpu_custom_call.1} parent=71 // pred_check_branch
          %469 = sbr.rel (%p467) target = $region76
        $region75: #{tpu_custom_call.1} parent=71 // pred_region
          %v470 = vld [vmem:[%s460] sm:$0xff]
          %vm471 = vcmask 261120
          %v472 = vsel %vm471, %v470, 0.0
          %473 = vadd.xlane.f32.xlu0 %v472
          %v474 = vpop.xlane.xlu0 %473
          %v475 = vrcp.pop 32.0
          %v476 = vmul.f32 %v474, %v475
          %v477 = vsub.f32 %v470, %v476
          %v478 = vmul.f32 %v477, %v477
          %v479 = vsel %vm471, %v478, 0.0
          %480 = vadd.xlane.f32.xlu0 %v479
          %v481 = vpop.xlane.xlu0 %480
          %v482 = vmul.f32 %v481, %v475
          %v483 = vadd.f32 %v482, 1e-06
          %v484 = vrsqrt.pop %v483
          %v485 = vmul.f32 %v477, %v484
          %v486 = vld [vmem:[%s1] sm:$0x1]
          %v488 = vlaneseq
          %v489 = vshrl.u32 %v488, 7
          %v490 = vsub.s32 0, %v489
          %v491 = vrot.slane %v486, %v490
          %v493 = vmul.f32 %v485, %v491
          %v494 = vld [vmem:[%s2] sm:$0x1]
          %v496 = vlaneseq
          %v497 = vshrl.u32 %v496, 7
          %v498 = vsub.s32 0, %v497
          %v499 = vrot.slane %v494, %v498
          %v501 = vadd.f32 %v493, %v499
          %v503 = vrot.slane %v501, 7
          %vm505 = vcmask 1040384
          %v506 = vsel %vm505, 0.0, %v503
          %v507 = vlaneseq
          %v508 = vand.u32 %v507, 127
          %vm509 = vcmp.lt.s32.totalorder %v508, 16
          %v510 = vsel %vm509, %v506, %v501
          %511 = vst.msk [vmem:[#allocation2] sm:$0xff] %vm471, %v510
          %vm512 = vcmask 64512
          %513 = vst.msk [vmem:[#allocation3] sm:$0xff] %vm512, 0.0
          %514 = vst.msk [vmem:[#allocation3 + $0x8] sm:$0xff] %vm512, 0.0
          %515 = vst.msk [vmem:[#allocation3 + $0x10] sm:$0xff] %vm512, 0.0
          %516 = vst.msk [vmem:[#allocation3 + $0x18] sm:$0xff] %vm512, 0.0
          %vm517 = vcmask 7168
          %518 = vst.msk [vmem:[#allocation5] sm:$0xff] %vm517, 0.0
          %519 = vst.msk [vmem:[#allocation5 + $0x8] sm:$0xff] %vm517, 0.0
          %520 = vst.msk [vmem:[#allocation5 + $0x10] sm:$0xff] %vm517, 0.0
          %521 = vst.msk [vmem:[#allocation5 + $0x18] sm:$0xff] %vm517, 0.0
        $region76: #{tpu_custom_call.1} parent=71 // pred_fallthru
          _
        %s522 = smul.u32 %s32, 8
        %s523 = scalar_lea.vmem [#allocation2], %s522
        %v524 = vld [vmem:[%s523] sm:$0xff]
        %v525 = vpack.c.bf16 %v524, %v524
        %v526 = vld [vmem:[%s4] sm:$0xf]
        %v527 = vld [vmem:[%s4 + $0x4] sm:$0xf]
        %v528 = vld [vmem:[%s4 + $0x8] sm:$0xf]
        %v529 = vld [vmem:[%s4 + $0xc] sm:$0xf]
        %v530 = vld [vmem:[%s5] sm:$0xff]
        %v531 = vld [vmem:[%s5 + $0x8] sm:$0xff]
        %v532 = vld [vmem:[%s5 + $0x10] sm:$0xff]
        %v533 = vld [vmem:[%s5 + $0x18] sm:$0xff]
        %535 = vset.pattern.permute.xlu0 0
        %536 = vperm.xlu0 %535, %v530
        %v537 = vpop.permute.xlu0 %536
        %540 = vset.pattern.permute.xlu0 0
        %541 = vperm.xlu0 %540, %v531
        %v542 = vpop.permute.xlu0 %541
        %545 = vset.pattern.permute.xlu0 0
        %546 = vperm.xlu0 %545, %v532
        %v547 = vpop.permute.xlu0 %546
        %550 = vset.pattern.permute.xlu0 0
        %551 = vperm.xlu0 %550, %v533
        %v552 = vpop.permute.xlu0 %551
        %v558 = vunpack.c.l.b16 %v526
        %v559 = vunpack.c.l.b16 %v527
        %v560 = vunpack.c.l.b16 %v528
        %v561 = vunpack.c.l.b16 %v529
        %v562 = vpack.c.b16 %v559, %v558
        %v563 = vpack.c.b16 %v561, %v560
        %vm564 = vcmask 261120
        %v566 = vsel %vm564, %v562, 0
        %v569 = vsel %vm564, %v563, 0
        %v572 = vsel %vm564, %v525, 0
        %574 = vmatprep.subr.bf16.mxu0 0
        %575 = vmatpush1.bf16.xpose.msra.mxu0 %v572
        %576 = vmatprep.subr.bf16.mxu0 0
        %577 = vmatpush1.bf16.xpose.msra.mxu0 0
        %578 = vmatprep.subr.bf16.mxu0 0
        %579 = vmatpush1.bf16.xpose.msra.mxu0 0
        %580 = vmatprep.subr.bf16.mxu0 0
        %581 = vmatpush1.bf16.xpose.msra.mxu0 0
        %582 = vmatprep.subr.bf16.mxu0 0
        %583 = vmatpush1.bf16.xpose.msra.mxu0 0
        %584 = vmatprep.subr.bf16.mxu0 0
        %585 = vmatpush1.bf16.xpose.msra.mxu0 0
        %586 = vmatprep.subr.bf16.mxu0 0
        %587 = vmatpush1.bf16.xpose.msra.mxu0 0
        %588 = vmatprep.subr.bf16.mxu0 0
        %589 = vmatpush1.bf16.xpose.msra.mxu0 0
        %590 = vmatprep.subr.bf16.mxu0 0
        %591 = vmatpush1.bf16.xpose.msra.mxu0 0
        %592 = vmatprep.subr.bf16.mxu0 0
        %593 = vmatpush1.bf16.xpose.msra.mxu0 0
        %594 = vmatprep.subr.bf16.mxu0 0
        %595 = vmatpush1.bf16.xpose.msra.mxu0 0
        %596 = vmatprep.subr.bf16.mxu0 0
        %597 = vmatpush1.bf16.xpose.msra.mxu0 0
        %598 = vmatprep.subr.bf16.mxu0 0
        %599 = vmatpush1.bf16.xpose.msra.mxu0 0
        %600 = vmatprep.subr.bf16.mxu0 0
        %601 = vmatpush1.bf16.xpose.msra.mxu0 0
        %602 = vmatprep.subr.bf16.mxu0 0
        %603 = vmatpush1.bf16.xpose.msra.mxu0 0
        %604 = vmatprep.subr.bf16.mxu0 0
        %605 = vmatpush1.bf16.xpose.msra.mxu0 0
        %606 = vmatprep.mubr.bf16.mxu0 0
        %607 = vmatmul.mubr.bf16.gmra.mrb[0].mxu0 %v566
        %v608 = vpop.f32.mrb[0].mxu0
        %v609 = vadd.f32 %v537, %v608
        %v610 = vpop.f32.mrb[0].mxu0
        %v611 = vpop.f32.mrb[0].mxu0
        %v612 = vadd.f32 %v542, %v611
        %v613 = vpop.f32.mrb[0].mxu0
        %614 = vmatprep.mubr.bf16.mxu0 0
        %615 = vmatmul.mubr.bf16.gmra.mrb[0].mxu0 %v569
        %v616 = vpop.f32.mrb[0].mxu0
        %v617 = vadd.f32 %v547, %v616
        %v618 = vpop.f32.mrb[0].mxu0
        %v619 = vpop.f32.mrb[0].mxu0
        %v620 = vadd.f32 %v552, %v619
        %v621 = vpop.f32.mrb[0].mxu0
        %622 = vdwg.mxu0
        %v623 = vld [vmem:[%s6] sm:$0xf]
        %v624 = vld [vmem:[%s6 + $0x4] sm:$0xf]
        %v625 = vld [vmem:[%s6 + $0x8] sm:$0xf]
        %v626 = vld [vmem:[%s6 + $0xc] sm:$0xf]
        %v627 = vld [vmem:[%s7] sm:$0xff]
        %v628 = vld [vmem:[%s7 + $0x8] sm:$0xff]
        %v629 = vld [vmem:[%s7 + $0x10] sm:$0xff]
        %v630 = vld [vmem:[%s7 + $0x18] sm:$0xff]
        %632 = vset.pattern.permute.xlu0 0
        %633 = vperm.xlu0 %632, %v627
        %v634 = vpop.permute.xlu0 %633
        %637 = vset.pattern.permute.xlu0 0
        %638 = vperm.xlu0 %637, %v628
        %v639 = vpop.permute.xlu0 %638
        %642 = vset.pattern.permute.xlu0 0
        %643 = vperm.xlu0 %642, %v629
        %v644 = vpop.permute.xlu0 %643
        %647 = vset.pattern.permute.xlu0 0
        %648 = vperm.xlu0 %647, %v630
        %v649 = vpop.permute.xlu0 %648
        %v655 = vunpack.c.l.b16 %v623
        %v656 = vunpack.c.l.b16 %v624
        %v657 = vunpack.c.l.b16 %v625
        %v658 = vunpack.c.l.b16 %v626
        %v659 = vpack.c.b16 %v656, %v655
        %v660 = vpack.c.b16 %v658, %v657
        %v662 = vsel %vm564, %v659, 0
        %v665 = vsel %vm564, %v660, 0
        %667 = vmatprep.subr.bf16.mxu0 0
        %668 = vmatpush1.bf16.xpose.msra.mxu0 %v572
        %669 = vmatprep.subr.bf16.mxu0 0
        %670 = vmatpush1.bf16.xpose.msra.mxu0 0
        %671 = vmatprep.subr.bf16.mxu0 0
        %672 = vmatpush1.bf16.xpose.msra.mxu0 0
        %673 = vmatprep.subr.bf16.mxu0 0
        %674 = vmatpush1.bf16.xpose.msra.mxu0 0
        %675 = vmatprep.subr.bf16.mxu0 0
        %676 = vmatpush1.bf16.xpose.msra.mxu0 0
        %677 = vmatprep.subr.bf16.mxu0 0
        %678 = vmatpush1.bf16.xpose.msra.mxu0 0
        %679 = vmatprep.subr.bf16.mxu0 0
        %680 = vmatpush1.bf16.xpose.msra.mxu0 0
        %681 = vmatprep.subr.bf16.mxu0 0
        %682 = vmatpush1.bf16.xpose.msra.mxu0 0
        %683 = vmatprep.subr.bf16.mxu0 0
        %684 = vmatpush1.bf16.xpose.msra.mxu0 0
        %685 = vmatprep.subr.bf16.mxu0 0
        %686 = vmatpush1.bf16.xpose.msra.mxu0 0
        %687 = vmatprep.subr.bf16.mxu0 0
        %688 = vmatpush1.bf16.xpose.msra.mxu0 0
        %689 = vmatprep.subr.bf16.mxu0 0
        %690 = vmatpush1.bf16.xpose.msra.mxu0 0
        %691 = vmatprep.subr.bf16.mxu0 0
        %692 = vmatpush1.bf16.xpose.msra.mxu0 0
        %693 = vmatprep.subr.bf16.mxu0 0
        %694 = vmatpush1.bf16.xpose.msra.mxu0 0
        %695 = vmatprep.subr.bf16.mxu0 0
        %696 = vmatpush1.bf16.xpose.msra.mxu0 0
        %697 = vmatprep.subr.bf16.mxu0 0
        %698 = vmatpush1.bf16.xpose.msra.mxu0 0
        %699 = vmatprep.mubr.bf16.mxu0 0
        %700 = vmatmul.mubr.bf16.gmra.mrb[0].mxu0 %v662
        %v701 = vpop.f32.mrb[0].mxu0
        %v702 = vadd.f32 %v634, %v701
        %v703 = vpop.f32.mrb[0].mxu0
        %v704 = vpop.f32.mrb[0].mxu0
        %v705 = vadd.f32 %v639, %v704
        %v706 = vpop.f32.mrb[0].mxu0
        %707 = vmatprep.mubr.bf16.mxu0 0
        %708 = vmatmul.mubr.bf16.gmra.mrb[0].mxu0 %v665
        %v709 = vpop.f32.mrb[0].mxu0
        %v710 = vadd.f32 %v644, %v709
        %v711 = vpop.f32.mrb[0].mxu0
        %v712 = vpop.f32.mrb[0].mxu0
        %v713 = vadd.f32 %v649, %v712
        %v714 = vpop.f32.mrb[0].mxu0
        %715 = vdwg.mxu0
        %v716 = vmax.f32 %v609, -60.0
        %v717 = vmax.f32 %v612, -60.0
        %v718 = vmax.f32 %v617, -60.0
        %v719 = vmax.f32 %v620, -60.0
        %v720 = vmin.f32 %v716, 30.0
        %v721 = vmin.f32 %v717, 30.0
        %v722 = vmin.f32 %v718, 30.0
        %v723 = vmin.f32 %v719, 30.0
        %v724 = vmul.f32 %v720, 1.442695
        %v725 = vpow.pop %v724
        %v726 = vmul.f32 %v721, 1.442695
        %v727 = vpow.pop %v726
        %v728 = vmul.f32 %v722, 1.442695
        %v729 = vpow.pop %v728
        %v730 = vmul.f32 %v723, 1.442695
        %v731 = vpow.pop %v730
        %736 = vrot.lane.b32.xlu0 %v725, 1
        %v737 = vpop.permute.xlu0 %736
        %738 = vrot.lane.b32.xlu0 %v727, 1
        %v739 = vpop.permute.xlu0 %738
        %740 = vrot.lane.b32.xlu0 %v729, 1
        %v741 = vpop.permute.xlu0 %740
        %742 = vrot.lane.b32.xlu0 %v731, 1
        %v743 = vpop.permute.xlu0 %742
        %vm748 = vcmask 7168
        %v749 = vsel %vm748, 0.0, %v737
        %v750 = vsel %vm748, 0.0, %v739
        %v751 = vsel %vm748, 0.0, %v741
        %v752 = vsel %vm748, 0.0, %v743
        %v753 = vadd.f32 %v725, %v749
        %v754 = vadd.f32 %v727, %v750
        %v755 = vadd.f32 %v729, %v751
        %v756 = vadd.f32 %v731, %v752
        %761 = vrot.lane.b32.xlu0 %v753, 2
        %v762 = vpop.permute.xlu0 %761
        %763 = vrot.lane.b32.xlu0 %v754, 2
        %v764 = vpop.permute.xlu0 %763
        %765 = vrot.lane.b32.xlu0 %v755, 2
        %v766 = vpop.permute.xlu0 %765
        %767 = vrot.lane.b32.xlu0 %v756, 2
        %v768 = vpop.permute.xlu0 %767
        %vm773 = vcmask 15360
        %v774 = vsel %vm773, 0.0, %v762
        %v775 = vsel %vm773, 0.0, %v764
        %v776 = vsel %vm773, 0.0, %v766
        %v777 = vsel %vm773, 0.0, %v768
        %v778 = vadd.f32 %v753, %v774
        %v779 = vadd.f32 %v754, %v775
        %v780 = vadd.f32 %v755, %v776
        %v781 = vadd.f32 %v756, %v777
        %786 = vrot.lane.b32.xlu0 %v778, 4
        %v787 = vpop.permute.xlu0 %786
        %788 = vrot.lane.b32.xlu0 %v779, 4
        %v789 = vpop.permute.xlu0 %788
        %790 = vrot.lane.b32.xlu0 %v780, 4
        %v791 = vpop.permute.xlu0 %790
        %792 = vrot.lane.b32.xlu0 %v781, 4
        %v793 = vpop.permute.xlu0 %792
        %vm798 = vcmask 31744
        %v799 = vsel %vm798, 0.0, %v787
        %v800 = vsel %vm798, 0.0, %v789
        %v801 = vsel %vm798, 0.0, %v791
        %v802 = vsel %vm798, 0.0, %v793
        %v803 = vadd.f32 %v778, %v799
        %v804 = vadd.f32 %v779, %v800
        %v805 = vadd.f32 %v780, %v801
        %v806 = vadd.f32 %v781, %v802
        %v807 = vld [vmem:[#allocation5] sm:$0xff]
        %v808 = vld [vmem:[#allocation5 + $0x8] sm:$0xff]
        %v809 = vld [vmem:[#allocation5 + $0x10] sm:$0xff]
        %v810 = vld [vmem:[#allocation5 + $0x18] sm:$0xff]
        %812 = vset.pattern.permute.xlu0 0
        %813 = vperm.xlu0 %812, %v807
        %v814 = vpop.permute.xlu0 %813
        %817 = vset.pattern.permute.xlu0 0
        %818 = vperm.xlu0 %817, %v808
        %v819 = vpop.permute.xlu0 %818
        %822 = vset.pattern.permute.xlu0 0
        %823 = vperm.xlu0 %822, %v809
        %v824 = vpop.permute.xlu0 %823
        %827 = vset.pattern.permute.xlu0 0
        %828 = vperm.xlu0 %827, %v810
        %v829 = vpop.permute.xlu0 %828
        %v831 = vadd.f32 %v814, %v803
        %v832 = vadd.f32 %v819, %v804
        %v833 = vadd.f32 %v824, %v805
        %v834 = vadd.f32 %v829, %v806
        %s835 = smul.u32 %s32, 32
        %s836 = scalar_lea.vmem [#allocation4], %s835
        %vm837 = vcmask 64512
        %838 = vst.msk [vmem:[%s836] sm:$0xff] %vm837, %v831
        %839 = vst.msk [vmem:[%s836 + $0x8] sm:$0xff] %vm837, %v832
        %840 = vst.msk [vmem:[%s836 + $0x10] sm:$0xff] %vm837, %v833
        %841 = vst.msk [vmem:[%s836 + $0x18] sm:$0xff] %vm837, %v834
        %v842 = vld [vmem:[#allocation5] sm:$0xff]
        %v843 = vld [vmem:[#allocation5 + $0x8] sm:$0xff]
        %v844 = vld [vmem:[#allocation5 + $0x10] sm:$0xff]
        %v845 = vld [vmem:[#allocation5 + $0x18] sm:$0xff]
        %850 = vrot.lane.b32.xlu0 %v803, 121
        %v851 = vpop.permute.xlu0 %850
        %852 = vrot.lane.b32.xlu0 %v804, 121
        %v853 = vpop.permute.xlu0 %852
        %854 = vrot.lane.b32.xlu0 %v805, 121
        %v855 = vpop.permute.xlu0 %854
        %856 = vrot.lane.b32.xlu0 %v806, 121
        %v857 = vpop.permute.xlu0 %856
        %v862 = vadd.f32 %v842, %v851
        %v863 = vadd.f32 %v843, %v853
        %v864 = vadd.f32 %v844, %v855
        %v865 = vadd.f32 %v845, %v857
        %866 = vst.msk [vmem:[#allocation5] sm:$0xff] %vm748, %v862
        %867 = vst.msk [vmem:[#allocation5 + $0x8] sm:$0xff] %vm748, %v863
        %868 = vst.msk [vmem:[#allocation5 + $0x10] sm:$0xff] %vm748, %v864
        %869 = vst.msk [vmem:[#allocation5 + $0x18] sm:$0xff] %vm748, %v865
        %v870 = vmul.f32 %v725, %v702
        %v871 = vmul.f32 %v727, %v705
        %v872 = vmul.f32 %v729, %v710
        %v873 = vmul.f32 %v731, %v713
        %v874 = vpack.c.bf16 %v871, %v870
        %v875 = vpack.c.bf16 %v873, %v872
        %v876 = vld [vmem:[#allocation3] sm:$0xff]
        %v877 = vld [vmem:[%s464] sm:$0xf]
        %v879 = vsel %vm837, %v874, 0
        %v882 = vsel %vm837, %v877, 0
        %884 = vmatprep.subr.bf16.mxu0 0
        %885 = vmatpush1.bf16.xpose.msra.mxu0 %v882
        %886 = vmatprep.subr.bf16.mxu0 0
        %887 = vmatpush1.bf16.xpose.msra.mxu0 0
        %888 = vmatprep.subr.bf16.mxu0 0
        %889 = vmatpush1.bf16.xpose.msra.mxu0 0
        %890 = vmatprep.subr.bf16.mxu0 0
        %891 = vmatpush1.bf16.xpose.msra.mxu0 0
        %892 = vmatprep.subr.bf16.mxu0 0
        %893 = vmatpush1.bf16.xpose.msra.mxu0 0
        %894 = vmatprep.subr.bf16.mxu0 0
        %895 = vmatpush1.bf16.xpose.msra.mxu0 0
        %896 = vmatprep.subr.bf16.mxu0 0
        %897 = vmatpush1.bf16.xpose.msra.mxu0 0
        %898 = vmatprep.subr.bf16.mxu0 0
        %899 = vmatpush1.bf16.xpose.msra.mxu0 0
        %900 = vmatprep.subr.bf16.mxu0 0
        %901 = vmatpush1.bf16.xpose.msra.mxu0 0
        %902 = vmatprep.subr.bf16.mxu0 0
        %903 = vmatpush1.bf16.xpose.msra.mxu0 0
        %904 = vmatprep.subr.bf16.mxu0 0
        %905 = vmatpush1.bf16.xpose.msra.mxu0 0
        %906 = vmatprep.subr.bf16.mxu0 0
        %907 = vmatpush1.bf16.xpose.msra.mxu0 0
        %908 = vmatprep.subr.bf16.mxu0 0
        %909 = vmatpush1.bf16.xpose.msra.mxu0 0
        %910 = vmatprep.subr.bf16.mxu0 0
        %911 = vmatpush1.bf16.xpose.msra.mxu0 0
        %912 = vmatprep.subr.bf16.mxu0 0
        %913 = vmatpush1.bf16.xpose.msra.mxu0 0
        %914 = vmatprep.subr.bf16.mxu0 0
        %915 = vmatpush1.bf16.xpose.msra.mxu0 0
        %916 = vmatprep.mubr.bf16.mxu0 0
        %917 = vmatmul.mubr.bf16.gmra.mrb[0].mxu0 %v879
        %v918 = vpop.f32.mrb[0].mxu0
        %v919 = vadd.f32 0.0, %v918
        %v920 = vpop.f32.mrb[0].mxu0
        %v921 = vpop.f32.mrb[0].mxu0
        %v922 = vpop.f32.mrb[0].mxu0
        %923 = vdwg.mxu0
        %v924 = vadd.f32 %v876, %v919
        %925 = vst.msk [vmem:[#allocation3] sm:$0xff] %vm837, %v924
        %v926 = vld [vmem:[#allocation3 + $0x8] sm:$0xff]
        %s927 = scalar_lea.vmem %s464, 4
        %v928 = vld [vmem:[%s927] sm:$0xf]
        %v930 = vrot.slane %v874, 4
        %v932 = vsel %vm837, %v930, 0
        %v935 = vsel %vm837, %v928, 0
        %937 = vmatprep.subr.bf16.mxu0 0
        %938 = vmatpush1.bf16.xpose.msra.mxu0 %v935
        %939 = vmatprep.subr.bf16.mxu0 0
        %940 = vmatpush1.bf16.xpose.msra.mxu0 0
        %941 = vmatprep.subr.bf16.mxu0 0
        %942 = vmatpush1.bf16.xpose.msra.mxu0 0
        %943 = vmatprep.subr.bf16.mxu0 0
        %944 = vmatpush1.bf16.xpose.msra.mxu0 0
        %945 = vmatprep.subr.bf16.mxu0 0
        %946 = vmatpush1.bf16.xpose.msra.mxu0 0
        %947 = vmatprep.subr.bf16.mxu0 0
        %948 = vmatpush1.bf16.xpose.msra.mxu0 0
        %949 = vmatprep.subr.bf16.mxu0 0
        %950 = vmatpush1.bf16.xpose.msra.mxu0 0
        %951 = vmatprep.subr.bf16.mxu0 0
        %952 = vmatpush1.bf16.xpose.msra.mxu0 0
        %953 = vmatprep.subr.bf16.mxu0 0
        %954 = vmatpush1.bf16.xpose.msra.mxu0 0
        %955 = vmatprep.subr.bf16.mxu0 0
        %956 = vmatpush1.bf16.xpose.msra.mxu0 0
        %957 = vmatprep.subr.bf16.mxu0 0
        %958 = vmatpush1.bf16.xpose.msra.mxu0 0
        %959 = vmatprep.subr.bf16.mxu0 0
        %960 = vmatpush1.bf16.xpose.msra.mxu0 0
        %961 = vmatprep.subr.bf16.mxu0 0
        %962 = vmatpush1.bf16.xpose.msra.mxu0 0
        %963 = vmatprep.subr.bf16.mxu0 0
        %964 = vmatpush1.bf16.xpose.msra.mxu0 0
        %965 = vmatprep.subr.bf16.mxu0 0
        %966 = vmatpush1.bf16.xpose.msra.mxu0 0
        %967 = vmatprep.subr.bf16.mxu0 0
        %968 = vmatpush1.bf16.xpose.msra.mxu0 0
        %969 = vmatprep.mubr.bf16.mxu0 0
        %970 = vmatmul.mubr.bf16.gmra.mrb[0].mxu0 %v932
        %v971 = vpop.f32.mrb[0].mxu0
        %v972 = vadd.f32 0.0, %v971
        %v973 = vpop.f32.mrb[0].mxu0
        %v974 = vpop.f32.mrb[0].mxu0
        %v975 = vpop.f32.mrb[0].mxu0
        %976 = vdwg.mxu0
        %v977 = vadd.f32 %v926, %v972
        %978 = vst.msk [vmem:[#allocation3 + $0x8] sm:$0xff] %vm837, %v977
        %v979 = vld [vmem:[#allocation3 + $0x10] sm:$0xff]
        %s980 = scalar_lea.vmem %s464, 8
        %v981 = vld [vmem:[%s980] sm:$0xf]
        %v983 = vsel %vm837, %v875, 0
        %v986 = vsel %vm837, %v981, 0
        %988 = vmatprep.subr.bf16.mxu0 0
        %989 = vmatpush1.bf16.xpose.msra.mxu0 %v986
        %990 = vmatprep.subr.bf16.mxu0 0
        %991 = vmatpush1.bf16.xpose.msra.mxu0 0
        %992 = vmatprep.subr.bf16.mxu0 0
        %993 = vmatpush1.bf16.xpose.msra.mxu0 0
        %994 = vmatprep.subr.bf16.mxu0 0
        %995 = vmatpush1.bf16.xpose.msra.mxu0 0
        %996 = vmatprep.subr.bf16.mxu0 0
        %997 = vmatpush1.bf16.xpose.msra.mxu0 0
        %998 = vmatprep.subr.bf16.mxu0 0
        %999 = vmatpush1.bf16.xpose.msra.mxu0 0
        %1000 = vmatprep.subr.bf16.mxu0 0
        %1001 = vmatpush1.bf16.xpose.msra.mxu0 0
        %1002 = vmatprep.subr.bf16.mxu0 0
        %1003 = vmatpush1.bf16.xpose.msra.mxu0 0
        %1004 = vmatprep.subr.bf16.mxu0 0
        %1005 = vmatpush1.bf16.xpose.msra.mxu0 0
        %1006 = vmatprep.subr.bf16.mxu0 0
        %1007 = vmatpush1.bf16.xpose.msra.mxu0 0
        %1008 = vmatprep.subr.bf16.mxu0 0
        %1009 = vmatpush1.bf16.xpose.msra.mxu0 0
        %1010 = vmatprep.subr.bf16.mxu0 0
        %1011 = vmatpush1.bf16.xpose.msra.mxu0 0
        %1012 = vmatprep.subr.bf16.mxu0 0
        %1013 = vmatpush1.bf16.xpose.msra.mxu0 0
        %1014 = vmatprep.subr.bf16.mxu0 0
        %1015 = vmatpush1.bf16.xpose.msra.mxu0 0
        %1016 = vmatprep.subr.bf16.mxu0 0
        %1017 = vmatpush1.bf16.xpose.msra.mxu0 0
        %1018 = vmatprep.subr.bf16.mxu0 0
        %1019 = vmatpush1.bf16.xpose.msra.mxu0 0
        %1020 = vmatprep.mubr.bf16.mxu0 0
        %1021 = vmatmul.mubr.bf16.gmra.mrb[0].mxu0 %v983
        %v1022 = vpop.f32.mrb[0].mxu0
        %v1023 = vadd.f32 0.0, %v1022
        %v1024 = vpop.f32.mrb[0].mxu0
        %v1025 = vpop.f32.mrb[0].mxu0
        %v1026 = vpop.f32.mrb[0].mxu0
        %1027 = vdwg.mxu0
        %v1028 = vadd.f32 %v979, %v1023
        %1029 = vst.msk [vmem:[#allocation3 + $0x10] sm:$0xff] %vm837, %v1028
        %v1030 = vld [vmem:[#allocation3 + $0x18] sm:$0xff]
        %s1031 = scalar_lea.vmem %s464, 12
        %v1032 = vld [vmem:[%s1031] sm:$0xf]
        %v1034 = vrot.slane %v875, 4
        %v1036 = vsel %vm837, %v1034, 0
        %v1039 = vsel %vm837, %v1032, 0
        %1041 = vmatprep.subr.bf16.mxu0 0
        %1042 = vmatpush1.bf16.xpose.msra.mxu0 %v1039
        %1043 = vmatprep.subr.bf16.mxu0 0
        %1044 = vmatpush1.bf16.xpose.msra.mxu0 0
        %1045 = vmatprep.subr.bf16.mxu0 0
        %1046 = vmatpush1.bf16.xpose.msra.mxu0 0
        %1047 = vmatprep.subr.bf16.mxu0 0
        %1048 = vmatpush1.bf16.xpose.msra.mxu0 0
        %1049 = vmatprep.subr.bf16.mxu0 0
        %1050 = vmatpush1.bf16.xpose.msra.mxu0 0
        %1051 = vmatprep.subr.bf16.mxu0 0
        %1052 = vmatpush1.bf16.xpose.msra.mxu0 0
        %1053 = vmatprep.subr.bf16.mxu0 0
        %1054 = vmatpush1.bf16.xpose.msra.mxu0 0
        %1055 = vmatprep.subr.bf16.mxu0 0
        %1056 = vmatpush1.bf16.xpose.msra.mxu0 0
        %1057 = vmatprep.subr.bf16.mxu0 0
        %1058 = vmatpush1.bf16.xpose.msra.mxu0 0
        %1059 = vmatprep.subr.bf16.mxu0 0
        %1060 = vmatpush1.bf16.xpose.msra.mxu0 0
        %1061 = vmatprep.subr.bf16.mxu0 0
        %1062 = vmatpush1.bf16.xpose.msra.mxu0 0
        %1063 = vmatprep.subr.bf16.mxu0 0
        %1064 = vmatpush1.bf16.xpose.msra.mxu0 0
        %1065 = vmatprep.subr.bf16.mxu0 0
        %1066 = vmatpush1.bf16.xpose.msra.mxu0 0
        %1067 = vmatprep.subr.bf16.mxu0 0
        %1068 = vmatpush1.bf16.xpose.msra.mxu0 0
        %1069 = vmatprep.subr.bf16.mxu0 0
        %1070 = vmatpush1.bf16.xpose.msra.mxu0 0
        %1071 = vmatprep.subr.bf16.mxu0 0
        %1072 = vmatpush1.bf16.xpose.msra.mxu0 0
        %1073 = vmatprep.mubr.bf16.mxu0 0
        %1074 = vmatmul.mubr.bf16.gmra.mrb[0].mxu0 %v1036
        %v1075 = vpop.f32.mrb[0].mxu0
        %v1076 = vadd.f32 0.0, %v1075
        %v1077 = vpop.f32.mrb[0].mxu0
        %v1078 = vpop.f32.mrb[0].mxu0
        %v1079 = vpop.f32.mrb[0].mxu0
        %1080 = vdwg.mxu0
        %v1081 = vadd.f32 %v1030, %v1076
        %1082 = vst.msk [vmem:[#allocation3 + $0x18] sm:$0xff] %vm837, %v1081
        // Predicated region
        $region77: #{tpu_custom_call.1} parent=71 // pred_check
          %p1083 = pneg %p466
        $region78: #{tpu_custom_call.1} parent=71 // pred_check_branch
          %1085 = sbr.rel (%p1083) target = $region80
        $region79: #{tpu_custom_call.1} parent=71 // pred_region
          %v1086 = vld [vmem:[#allocation2] sm:$0xff]
          %v1087 = vpack.c.bf16 %v1086, %v1086
          %v1088 = vld [vmem:[%s8] sm:$0xf]
          %v1089 = vld [vmem:[%s8 + $0x4] sm:$0xf]
          %v1090 = vld [vmem:[%s8 + $0x8] sm:$0xf]
          %v1091 = vld [vmem:[%s8 + $0xc] sm:$0xf]
          %v1092 = vld [vmem:[%s9] sm:$0xff]
          %v1093 = vld [vmem:[%s9 + $0x8] sm:$0xff]
          %v1094 = vld [vmem:[%s9 + $0x10] sm:$0xff]
          %v1095 = vld [vmem:[%s9 + $0x18] sm:$0xff]
          %1097 = vset.pattern.permute.xlu0 0
          %1098 = vperm.xlu0 %1097, %v1092
          %v1099 = vpop.permute.xlu0 %1098
          %1102 = vset.pattern.permute.xlu0 0
          %1103 = vperm.xlu0 %1102, %v1093
          %v1104 = vpop.permute.xlu0 %1103
          %1107 = vset.pattern.permute.xlu0 0
          %1108 = vperm.xlu0 %1107, %v1094
          %v1109 = vpop.permute.xlu0 %1108
          %1112 = vset.pattern.permute.xlu0 0
          %1113 = vperm.xlu0 %1112, %v1095
          %v1114 = vpop.permute.xlu0 %1113
          %v1120 = vunpack.c.l.b16 %v1088
          %v1121 = vunpack.c.l.b16 %v1089
          %v1122 = vunpack.c.l.b16 %v1090
          %v1123 = vunpack.c.l.b16 %v1091
          %v1124 = vpack.c.b16 %v1121, %v1120
          %v1125 = vpack.c.b16 %v1123, %v1122
          %v1127 = vsel %vm564, %v1124, 0
          %v1130 = vsel %vm564, %v1125, 0
          %v1133 = vsel %vm564, %v1087, 0
          %1135 = vmatprep.subr.bf16.mxu0 0
          %1136 = vmatpush1.bf16.xpose.msra.mxu0 %v1133
          %1137 = vmatprep.subr.bf16.mxu0 0
          %1138 = vmatpush1.bf16.xpose.msra.mxu0 0
          %1139 = vmatprep.subr.bf16.mxu0 0
          %1140 = vmatpush1.bf16.xpose.msra.mxu0 0
          %1141 = vmatprep.subr.bf16.mxu0 0
          %1142 = vmatpush1.bf16.xpose.msra.mxu0 0
          %1143 = vmatprep.subr.bf16.mxu0 0
          %1144 = vmatpush1.bf16.xpose.msra.mxu0 0
          %1145 = vmatprep.subr.bf16.mxu0 0
          %1146 = vmatpush1.bf16.xpose.msra.mxu0 0
          %1147 = vmatprep.subr.bf16.mxu0 0
          %1148 = vmatpush1.bf16.xpose.msra.mxu0 0
          %1149 = vmatprep.subr.bf16.mxu0 0
          %1150 = vmatpush1.bf16.xpose.msra.mxu0 0
          %1151 = vmatprep.subr.bf16.mxu0 0
          %1152 = vmatpush1.bf16.xpose.msra.mxu0 0
          %1153 = vmatprep.subr.bf16.mxu0 0
          %1154 = vmatpush1.bf16.xpose.msra.mxu0 0
          %1155 = vmatprep.subr.bf16.mxu0 0
          %1156 = vmatpush1.bf16.xpose.msra.mxu0 0
          %1157 = vmatprep.subr.bf16.mxu0 0
          %1158 = vmatpush1.bf16.xpose.msra.mxu0 0
          %1159 = vmatprep.subr.bf16.mxu0 0
          %1160 = vmatpush1.bf16.xpose.msra.mxu0 0
          %1161 = vmatprep.subr.bf16.mxu0 0
          %1162 = vmatpush1.bf16.xpose.msra.mxu0 0
          %1163 = vmatprep.subr.bf16.mxu0 0
          %1164 = vmatpush1.bf16.xpose.msra.mxu0 0
          %1165 = vmatprep.subr.bf16.mxu0 0
          %1166 = vmatpush1.bf16.xpose.msra.mxu0 0
          %1167 = vmatprep.mubr.bf16.mxu0 0
          %1168 = vmatmul.mubr.bf16.gmra.mrb[0].mxu0 %v1127
          %v1169 = vpop.f32.mrb[0].mxu0
          %v1170 = vadd.f32 %v1099, %v1169
          %v1171 = vpop.f32.mrb[0].mxu0
          %v1172 = vpop.f32.mrb[0].mxu0
          %v1173 = vadd.f32 %v1104, %v1172
          %v1174 = vpop.f32.mrb[0].mxu0
          %1175 = vmatprep.mubr.bf16.mxu0 0
          %1176 = vmatmul.mubr.bf16.gmra.mrb[0].mxu0 %v1130
          %v1177 = vpop.f32.mrb[0].mxu0
          %v1178 = vadd.f32 %v1109, %v1177
          %v1179 = vpop.f32.mrb[0].mxu0
          %v1180 = vpop.f32.mrb[0].mxu0
          %v1181 = vadd.f32 %v1114, %v1180
          %v1182 = vpop.f32.mrb[0].mxu0
          %1183 = vdwg.mxu0
          %v1184 = vxor.u32 %v1170, 2147483648
          %v1185 = vxor.u32 %v1173, 2147483648
          %v1186 = vxor.u32 %v1178, 2147483648
          %v1187 = vxor.u32 %v1181, 2147483648
          %v1188 = vmul.f32 %v1184, 1.442695
          %v1189 = vpow.pop %v1188
          %v1190 = vmul.f32 %v1185, 1.442695
          %v1191 = vpow.pop %v1190
          %v1192 = vmul.f32 %v1186, 1.442695
          %v1193 = vpow.pop %v1192
          %v1194 = vmul.f32 %v1187, 1.442695
          %v1195 = vpow.pop %v1194
          %v1196 = vadd.f32 %v1189, 1.0
          %v1197 = vadd.f32 %v1191, 1.0
          %v1198 = vadd.f32 %v1193, 1.0
          %v1199 = vadd.f32 %v1195, 1.0
          %v1200 = vrcp.pop %v1196
          %v1201 = vmul.f32 1.0, %v1200
          %v1202 = vrcp.pop %v1197
          %v1203 = vmul.f32 1.0, %v1202
          %v1204 = vrcp.pop %v1198
          %v1205 = vmul.f32 1.0, %v1204
          %v1206 = vrcp.pop %v1199
          %v1207 = vmul.f32 1.0, %v1206
          %v1208 = vld [vmem:[#allocation4] sm:$0xff]
          %v1209 = vld [vmem:[#allocation4 + $0x8] sm:$0xff]
          %v1210 = vld [vmem:[#allocation4 + $0x10] sm:$0xff]
          %v1211 = vld [vmem:[#allocation4 + $0x18] sm:$0xff]
          %v1212 = vrcp.pop %v1208
          %v1213 = vrcp.pop %v1209
          %v1214 = vrcp.pop %v1210
          %v1215 = vrcp.pop %v1211
          %v1216 = vld [vmem:[#allocation3] sm:$0xff]
          %v1217 = vld [vmem:[#allocation3 + $0x8] sm:$0xff]
          %v1218 = vld [vmem:[#allocation3 + $0x10] sm:$0xff]
          %v1219 = vld [vmem:[#allocation3 + $0x18] sm:$0xff]
          %v1220 = vmul.f32 %v1201, %v1216
          %v1221 = vmul.f32 %v1203, %v1217
          %v1222 = vmul.f32 %v1205, %v1218
          %v1223 = vmul.f32 %v1207, %v1219
          %v1224 = vmul.f32 %v1220, %v1212
          %v1225 = vmul.f32 %v1221, %v1213
          %v1226 = vmul.f32 %v1222, %v1214
          %v1227 = vmul.f32 %v1223, %v1215
          %v1228 = vpack.c.bf16 %v1225, %v1224
          %v1229 = vpack.c.bf16 %v1227, %v1226
          %v1230 = vld [vmem:[%s10] sm:$0xf]
          %v1231 = vld [vmem:[%s10 + $0x4] sm:$0xf]
          %v1232 = vld [vmem:[%s10 + $0x8] sm:$0xf]
          %v1233 = vld [vmem:[%s10 + $0xc] sm:$0xf]
          %v1234 = vld [vmem:[%s11] sm:$0x1]
          %v1236 = vlaneseq
          %v1237 = vshrl.u32 %v1236, 7
          %v1238 = vsub.s32 0, %v1237
          %v1239 = vrot.slane %v1234, %v1238
          %1241 = vxpose.xlu0.c.b16.start [1/8] %v1228, 128
          %1242 = vxpose.xlu0.c.b16.cont [2/8] %v1229, 128
          %1243 = vxpose.xlu0.c.b16.cont [3/8] 0, 128
          %1244 = vxpose.xlu0.c.b16.cont [4/8] 0, 128
          %1245 = vxpose.xlu0.c.b16.cont [5/8] 0, 128
          %1246 = vxpose.xlu0.c.b16.cont [6/8] 0, 128
          %1247 = vxpose.xlu0.c.b16.cont [7/8] 0, 128
          %1248 = vxpose.xlu0.c.b16.end [8/8] 0, 128
          %v1249 = vpop.trf.xlu0
          %v1250 = vpop.trf.xlu0
          %v1251 = vpop.trf.xlu0
          %v1252 = vpop.trf.xlu0
          %v1253 = vpop.trf.xlu0
          %v1254 = vpop.trf.xlu0
          %v1255 = vpop.trf.xlu0
          %v1256 = vpop.trf.xlu0
          %v1261 = vunpack.c.l.b16 %v1230
          %v1262 = vunpack.c.l.b16 %v1231
          %v1263 = vunpack.c.l.b16 %v1232
          %v1264 = vunpack.c.l.b16 %v1233
          %v1265 = vpack.c.b16 %v1262, %v1261
          %v1266 = vpack.c.b16 %v1264, %v1263
          %v1270 = vsel %vm564, %v1249, 0
          %1272 = vmatprep.subr.bf16.mxu0 0
          %1273 = vmatpush1.bf16.msra.mxu0 %v1265
          %1274 = vmatprep.subr.bf16.mxu0 0
          %1275 = vmatpush1.bf16.msra.mxu0 %v1266
          %1276 = vmatprep.subr.bf16.mxu0 0
          %1277 = vmatpush1.bf16.msra.mxu0 0
          %1278 = vmatprep.subr.bf16.mxu0 0
          %1279 = vmatpush1.bf16.msra.mxu0 0
          %1280 = vmatprep.subr.bf16.mxu0 0
          %1281 = vmatpush1.bf16.msra.mxu0 0
          %1282 = vmatprep.subr.bf16.mxu0 0
          %1283 = vmatpush1.bf16.msra.mxu0 0
          %1284 = vmatprep.subr.bf16.mxu0 0
          %1285 = vmatpush1.bf16.msra.mxu0 0
          %1286 = vmatprep.subr.bf16.mxu0 0
          %1287 = vmatpush1.bf16.msra.mxu0 0
          %1288 = vmatprep.subr.bf16.mxu0 0
          %1289 = vmatpush1.bf16.msra.mxu0 0
          %1290 = vmatprep.subr.bf16.mxu0 0
          %1291 = vmatpush1.bf16.msra.mxu0 0
          %1292 = vmatprep.subr.bf16.mxu0 0
          %1293 = vmatpush1.bf16.msra.mxu0 0
          %1294 = vmatprep.subr.bf16.mxu0 0
          %1295 = vmatpush1.bf16.msra.mxu0 0
          %1296 = vmatprep.subr.bf16.mxu0 0
          %1297 = vmatpush1.bf16.msra.mxu0 0
          %1298 = vmatprep.subr.bf16.mxu0 0
          %1299 = vmatpush1.bf16.msra.mxu0 0
          %1300 = vmatprep.subr.bf16.mxu0 0
          %1301 = vmatpush1.bf16.msra.mxu0 0
          %1302 = vmatprep.subr.bf16.mxu0 0
          %1303 = vmatpush1.bf16.msra.mxu0 0
          %1304 = vmatprep.mubr.bf16.mxu0 0
          %1305 = vmatmul.mubr.bf16.gmra.mrb[0].mxu0 %v1270
          %v1306 = vpop.f32.mrb[0].mxu0
          %v1307 = vadd.f32 %v1239, %v1306
          %v1308 = vpop.f32.mrb[0].mxu0
          %v1309 = vpop.f32.mrb[0].mxu0
          %v1310 = vpop.f32.mrb[0].mxu0
          %1311 = vdwg.mxu0
          %v1312 = vld [vmem:[%s460] sm:$0xff]
          %v1313 = vld [vmem:[%s12] sm:$0xff]
          %1315 = vset.pattern.permute.xlu0 0
          %1316 = vperm.xlu0 %1315, %v1313
          %v1317 = vpop.permute.xlu0 %1316
          %v1319 = vmul.f32 %v1307, %v1317
          %v1320 = vadd.f32 %v1312, %v1319
          %1321 = vst.msk [vmem:[%s456] sm:$0xff] %vm564, %v1320
        $region80: #{tpu_custom_call.1} parent=71 // pred_fallthru
          _
        %s1322 = sand.u32 %s330, 1
        %s1323 = scalar_lea.sflag [#allocation7], %s1322
        %s1324 = sand.u32 %s330, 1
        %s1325 = smul.addr %s1324, 8
        %s1326 = scalar_lea.vmem [#allocation6], %s1325
        // Predicated region
        $region81: #{tpu_custom_call.1} parent=71 // pred_check
          %p1327 = pneg %p340
        $region82: #{tpu_custom_call.1} parent=71 // pred_check_branch
          %1329 = sbr.rel (%p1327) target = $region84
        $region83: #{tpu_custom_call.1} parent=71 // pred_region
          %s1331 = ssub.s32 128, 128
          %1332 = vsyncadd %s1323, %s1331
          %s1333 = smul.addr %s31, 128
          %s1334 = scalar_lea.hbm %s13, %s1333
          %s1336 = sshll.u32 %s1326, 4
          %s1337 = int_to_ptr.vmem [resolvable:$true] %s1336
          %1339 = dma.vmem_to_hbm [thread:$0]  %s1337, 128, %s1334, %s1323
        $region84: #{tpu_custom_call.1} parent=71 // pred_fallthru
          _
      $region72: #{tpu_custom_call.1} parent=5 // pred_fallthru
        _
      %p1340 = scmp.le.s32.totalorder 2, %s22
      // Predicated region
      $region85: #{tpu_custom_call.1} parent=5 // pred_check
        %p1341 = pneg %p1340
      $region86: #{tpu_custom_call.1} parent=5 // pred_check_branch
        %1343 = sbr.rel (%p1341) target = $region88
      $region87: #{tpu_custom_call.1} parent=5 // pred_region
        %s1344 = ssub.s32 %s22, 2
        // Predicated region
        $region89: #{tpu_custom_call.1} parent=87 // pred_check
          %p1345 = pneg %p346
        $region90: #{tpu_custom_call.1} parent=87 // pred_check_branch
          %1347 = sbr.rel (%p1345) target = $region92
        $region91: #{tpu_custom_call.1} parent=87 // pred_region
          %s1348 = sand.u32 %s331, 1
          %s1349 = scalar_lea.sflag [#allocation7], %s1348
          %s1350 = sand.u32 %s331, 1
          %s1351 = smul.addr %s1350, 8
          %s1352 = scalar_lea.vmem [#allocation6], %s1351
          %1353 = dma.done %s1349, 128
        $region92: #{tpu_custom_call.1} parent=87 // pred_fallthru
          _
      $region88: #{tpu_custom_call.1} parent=5 // pred_fallthru
        _
    $region6: #{tpu_custom_call.1} parent=1 // loop_footer
      %s26 = sadd.s32 1, %s22
    $region7: #{tpu_custom_call.1} parent=1 // loop_footer_branch
      %21 = sbr.rel target = $region3
    $region8: #{tpu_custom_call.1} parent=1 // loop_exit
      _
    %1354 = vsyncpa [#allocation7], 1
    %s1355 = scalar_lea.sflag [#allocation7], 1
    %1356 = vsyncpa %s1355, 1

</llo_original>
